<compile_context>
chip_gen: v7x
topology: tpu7x:2x2x1
jax: 0.10.0
libtpu: 0.0.40
codegen_flags: <defaults>
</compile_context>

<pallas_src>
import jax
import jax.numpy as jnp
from jax import lax
from jax.experimental import pallas as pl
from jax.experimental.pallas import tpu as pltpu


def _attention_kernel(x_ref, wth_ref, wph_ref, wg_ref, wo_ref, gamma_ref,
                      out_ref, phi_ref, g_ref):
    # x_ref   : (HW, C)      bf16, quad-major pixel order (resident per batch)
    # wth_ref : (C, C/8)     bf16  theta projection
    # wph_ref : (C, C/8)     bf16  phi projection
    # wg_ref  : (C, C/2)     bf16  g projection
    # wo_ref  : (C/2, C)     bf16  output projection
    # gamma_ref: (1, 1)      f32   SMEM scalar
    # out_ref : (TQ, C)      bf16  query tile of the output (quad-major order)
    # phi_ref : (HW/4, C/8)  bf16  scratch: pooled phi
    # g_ref   : (HW/4, C/2+1) bf16 scratch: pooled g | ones column
    q = pl.program_id(1)

    hwq, c8 = phi_ref.shape
    c2 = g_ref.shape[1] - 1
    tq = out_ref.shape[0]

    @pl.when(q == 0)
    def _():
        # Pooled phi / g once per batch element.  Rows of x are quad-major:
        # row-slab s holds corner s of every 2x2 pooling window, so the
        # max-pool is an elementwise max across the 4 slabs.  Two narrow
        # matmuls per slab (no unaligned column slices of a fused result);
        # max-accumulate into the bf16 scratch so only one slab's f32
        # temporaries are ever live (max is monotone, so bf16 accumulation of
        # the max equals the rounded f32 max).
        def slab(s):
            xs = x_ref[s * hwq:(s + 1) * hwq, :]
            p = jnp.dot(xs, wph_ref[...], preferred_element_type=jnp.float32)
            g = jnp.dot(xs, wg_ref[...], preferred_element_type=jnp.float32)
            return p, g

        p0, g0 = slab(0)
        phi_ref[...] = p0.astype(phi_ref.dtype)
        g_ref[:, :c2] = g0.astype(g_ref.dtype)
        # Ones column: folds the softmax row-sum into the attn matmul (MXU),
        # replacing a (TQ, HW/4) lane reduction on the XLU every q step.
        g_ref[:, c2:c2 + 1] = jnp.ones((hwq, 1), g_ref.dtype)

        for s in range(1, 4):
            ps, gs = slab(s)
            phi_ref[...] = jnp.maximum(phi_ref[...], ps.astype(phi_ref.dtype))
            g_ref[:, :c2] = jnp.maximum(g_ref[:, :c2], gs.astype(g_ref.dtype))

    # ------------------ per query-tile work ------------------------------
    row0 = pl.multiple_of(q * tq, tq)
    x_t = x_ref[pl.ds(row0, tq), :]                               # (TQ, C) bf16

    # theta for this tile only (removes the old (HW, C/8) scratch and the
    # serialized q==0 projection spike; same total FLOPs).
    theta_t = jnp.dot(x_t, wth_ref[...],
                      preferred_element_type=jnp.float32
                      ).astype(jnp.bfloat16)                      # (TQ, C/8)

    # logits = theta_t @ phi^T : contraction on dim 1 of both operands
    # (flash-attention q@k^T form), no materialized transpose of phi.
    logits = lax.dot_general(
        theta_t, phi_ref[...],
        dimension_numbers=(((1,), (1,)), ((), ())),
        preferred_element_type=jnp.float32)                       # (TQ, HW/4)

    # Softmax with deferred normalization.  Row max in f32 (XLU); exp in bf16
    # (bf16 EUP on v6e/v7x, Mosaic upcasts on v5e) feeds the MXU directly.
    m = jnp.max(logits, axis=-1, keepdims=True)
    e = jnp.exp((logits - m).astype(jnp.bfloat16))                # (TQ, HW/4)

    # One MXU pass gives both e @ g and the row sums (via the ones column).
    att_l = jnp.dot(e, g_ref[...],
                    preferred_element_type=jnp.float32)           # (TQ, C/2+1)
    l = att_l[:, c2:c2 + 1]                                       # (TQ, 1)
    attn = att_l[:, :c2] * pl.reciprocal(l, approx=True)          # (TQ, C/2)

    o = jnp.dot(attn.astype(jnp.bfloat16), wo_ref[...],
                preferred_element_type=jnp.float32)               # (TQ, C)

    gamma = gamma_ref[0, 0]
    out_ref[...] = (gamma * o + x_t.astype(jnp.float32)).astype(out_ref.dtype)


def attention_pallas(x, w_theta, w_phi, w_g, w_o, gamma, *, tq=None):
    """x: (B, C, H, W) float32 (NCHW, like the PyTorch module).
    w_*: torch Conv2d-shaped weights (out, in, 1, 1).  Returns (B, C, H, W)."""
    B, C, H, W = x.shape
    assert C % 8 == 0 and H % 2 == 0 and W % 2 == 0
    HW = H * W
    HWq = HW // 4
    C8, C2 = C // 8, C // 2
    assert HW % 8 == 0

    # ---- generation-aware VMEM budget & query-tile size ------------------
    try:
        vmem_phys = pltpu.get_tpu_info().vmem_capacity_bytes
    except Exception:
        vmem_phys = 64 * 1024 * 1024        # conservative (v7x-sized) fallback
    vmem_limit = max(32 * 1024 * 1024,
                     min(int(vmem_phys) * 3 // 4, 96 * 1024 * 1024))

    def vmem_need(t):
        bf = 2
        x_slab = 2 * HW * C * bf                         # double-buffered input
        scratch = HWq * (C8 + C2 + 1) * bf               # phi + g|ones
        weights = 2 * (C * (2 * C8 + C2) + C2 * C) * bf
        out_buf = 2 * t * C * bf                         # double-buffered output
        temps = t * HWq * (4 + bf) + t * (C8 + C2 + 1 + 2 * C) * 4
        return x_slab + scratch + weights + out_buf + temps

    if tq is None:
        tq = min(512, HW)
    while tq > 8 and (HW % tq or tq % 8 or vmem_need(tq) > vmem_limit * 4 // 5):
        tq //= 2
    assert tq >= 8 and HW % tq == 0 and tq % 8 == 0
    nq = HW // tq

    # Quad-major layout: (B, 4, H/2, W/2, C) flattened to (B, HW, C); the 4
    # row-slabs are the 4 corners of every 2x2 pooling window.  Cast to bf16
    # here so the permute+cast is one fused XLA pass.
    x_nhwc = jnp.transpose(x, (0, 2, 3, 1))                      # (B, H, W, C)
    x_q = jnp.transpose(
        x_nhwc.reshape(B, H // 2, 2, W // 2, 2, C),
        (0, 2, 4, 1, 3, 5)).reshape(B, HW, C).astype(jnp.bfloat16)

    # torch Conv2d weight is (out, in, 1, 1); kernel wants (in, out).
    wth = jnp.asarray(w_theta, jnp.float32).reshape(C8, C).T.astype(jnp.bfloat16)
    wph = jnp.asarray(w_phi, jnp.float32).reshape(C8, C).T.astype(jnp.bfloat16)
    wg = jnp.asarray(w_g, jnp.float32).reshape(C2, C).T.astype(jnp.bfloat16)
    wo = jnp.asarray(w_o, jnp.float32).reshape(C, C2).T.astype(jnp.bfloat16)
    gamma_arr = jnp.asarray(gamma, jnp.float32).reshape(1, 1)

    # TODO(synk): for B == 1 on v7x (2 TensorCores) a leading core-split axis
    # over the query range would keep both cores busy; with B >= 2 the batch
    # axis already parallelizes across cores.
    out_q = pl.pallas_call(
        _attention_kernel,
        out_shape=jax.ShapeDtypeStruct((B, HW, C), jnp.bfloat16),
        grid_spec=pltpu.PrefetchScalarGridSpec(
            num_scalar_prefetch=0,
            grid=(B, nq),
            in_specs=[
                # whole batch-element slab; constant along q -> DMA'd once/b
                pl.BlockSpec((pl.Squeezed(), HW, C), lambda b, q: (b, 0, 0)),
                pl.BlockSpec((C, C8), lambda b, q: (0, 0)),
                pl.BlockSpec((C, C8), lambda b, q: (0, 0)),
                pl.BlockSpec((C, C2), lambda b, q: (0, 0)),
                pl.BlockSpec((C2, C), lambda b, q: (0, 0)),
                pl.BlockSpec((1, 1), lambda b, q: (0, 0),
                             memory_space=pltpu.MemorySpace.SMEM),
            ],
            out_specs=pl.BlockSpec((pl.Squeezed(), tq, C),
                                   lambda b, q: (b, q, 0)),
            scratch_shapes=[
                pltpu.VMEM((HWq, C8), jnp.bfloat16),      # pooled phi
                pltpu.VMEM((HWq, C2 + 1), jnp.bfloat16),  # pooled g | ones col
            ],
        ),
        compiler_params=pltpu.CompilerParams(
            # q axis must be sequential: phi/g are cached in scratch at the
            # q == 0 step of every batch element.
            dimension_semantics=("parallel", "arbitrary"),
            vmem_limit_bytes=int(vmem_limit),
        ),
    )(x_q, wth, wph, wg, wo, gamma_arr)

    # Un-permute quad-major rows back to (B, H, W, C) in bf16, then NCHW; the
    # upcast to f32 fuses with the final transpose.
    out = out_q.reshape(B, 2, 2, H // 2, W // 2, C)
    out = jnp.transpose(out, (0, 3, 1, 4, 2, 5)).reshape(B, H, W, C)
    return jnp.transpose(out, (0, 3, 1, 2)).astype(jnp.float32)


def attention_ref(x, w_theta, w_phi, w_g, w_o, gamma):
    """Pure-JAX f32 reference mirroring the PyTorch forward (NCHW)."""
    B, C, H, W = x.shape
    C8, C2 = C // 8, C // 2
    theta = jnp.einsum('bchw,oc->bohw', x, w_theta.reshape(C8, C))
    phi = jnp.einsum('bchw,oc->bohw', x, w_phi.reshape(C8, C))
    g = jnp.einsum('bchw,oc->bohw', x, w_g.reshape(C2, C))

    def pool(t):
        b, c, h, w = t.shape
        return jnp.max(t.reshape(b, c, h // 2, 2, w // 2, 2), axis=(3, 5))

    theta = theta.reshape(B, C8, H * W)
    phi = pool(phi).reshape(B, C8, H * W // 4)
    g = pool(g).reshape(B, C2, H * W // 4)
    beta = jax.nn.softmax(jnp.einsum('bcp,bcq->bpq', theta, phi), axis=-1)
    o_pre = jnp.einsum('bcq,bpq->bcp', g, beta).reshape(B, C2, H, W)
    o = jnp.einsum('bchw,oc->bohw', o_pre, w_o.reshape(C, C2))
    return gamma * o + x


if __name__ == "__main__":
    key = jax.random.PRNGKey(0)
    B, C, H, W = 2, 32, 16, 16            # ch must be divisible by 8
    kx, kt, kp, kg, ko = jax.random.split(key, 5)

    x = jax.random.normal(kx, (B, C, H, W), jnp.float32)
    # TODO(synk): spectral_norm is a training-time weight reparameterization;
    # weights here are plain tensors (equivalent to use_sn=False at inference).
    w_theta = jax.random.normal(kt, (C // 8, C, 1, 1), jnp.float32) * 0.1
    w_phi = jax.random.normal(kp, (C // 8, C, 1, 1), jnp.float32) * 0.1
    w_g = jax.random.normal(kg, (C // 2, C, 1, 1), jnp.float32) * 0.1
    w_o = jax.random.normal(ko, (C, C // 2, 1, 1), jnp.float32) * 0.1
    gamma0 = 0.0                          # nn.Parameter(torch.tensor(0.0))

    # Module-faithful run (gamma initialized to 0).  tq=128 exercises the
    # query-tiled grid (HW=256 -> 2 q-tiles per batch element).
    out = attention_pallas(x, w_theta, w_phi, w_g, w_o, gamma0, tq=128)
    jax.block_until_ready(out)

    # Sanity check with a nonzero gamma so the full attention path is used.
    # Tolerance reflects the fully-bf16 pipeline (bf16 inputs/weights/exp and
    # bf16 output store; accumulation stays f32).
    out_chk = attention_pallas(x, w_theta, w_phi, w_g, w_o, 0.7, tq=128)
    ref_chk = attention_ref(x, w_theta, w_phi, w_g, w_o, 0.7)
    err = float(jnp.max(jnp.abs(out_chk - ref_chk)))
    assert jnp.allclose(out_chk, ref_chk, rtol=3e-2, atol=3e-2), err

    print("KERNEL_OK")
</pallas_src>

<mosaic_0001>
module attributes {stable_mosaic.version = 11 : i64} {
  func.func @_attention_kernel(%arg0: i32, %arg1: i32, %arg2: memref<1x256x32xbf16, #tpu.memory_space<vmem>>, %arg3: memref<32x4xbf16, #tpu.memory_space<vmem>>, %arg4: memref<32x4xbf16, #tpu.memory_space<vmem>>, %arg5: memref<32x16xbf16, #tpu.memory_space<vmem>>, %arg6: memref<16x32xbf16, #tpu.memory_space<vmem>>, %arg7: memref<1x1xf32, #tpu.memory_space<smem>>, %arg8: memref<1x128x32xbf16, #tpu.memory_space<vmem>>, %arg9: memref<64x4xbf16, #tpu.memory_space<vmem>>, %arg10: memref<64x17xbf16, #tpu.memory_space<vmem>>) attributes {dimension_semantics = [#tpu.dimension_semantics<parallel>, #tpu.dimension_semantics<arbitrary>], iteration_bounds = array<i64: 2, 2>, scalar_prefetch = 0 : i64, scratch_operands = 2 : i64, tpu.core_type = #tpu.core_type<tc>, window_params = [{transform_indices = @transform_0, window_bounds = array<i64: 1, 256, 32>}, {pipeline_mode = #tpu.pipeline_mode<synchronous>, transform_indices = @transform_1, window_bounds = array<i64: 32, 4>}, {pipeline_mode = #tpu.pipeline_mode<synchronous>, transform_indices = @transform_2, window_bounds = array<i64: 32, 4>}, {pipeline_mode = #tpu.pipeline_mode<synchronous>, transform_indices = @transform_3, window_bounds = array<i64: 32, 16>}, {pipeline_mode = #tpu.pipeline_mode<synchronous>, transform_indices = @transform_4, window_bounds = array<i64: 16, 32>}, {transform_indices = @transform_5, window_bounds = array<i64: 1, 1>}, {transform_indices = @transform_6, window_bounds = array<i64: 1, 128, 32>}]} {
    %c0_i32 = arith.constant 0 : i32
    %0 = arith.cmpi eq, %arg1, %c0_i32 : i32
    %1 = arith.extui %0 : i1 to i32
    %c0_i32_0 = arith.constant 0 : i32
    %2 = arith.cmpi ne, %1, %c0_i32_0 : i32
    scf.if %2 {
      %c0_19 = arith.constant 0 : index
      %c0_20 = arith.constant 0 : index
      %c0_21 = arith.constant 0 : index
      %38 = vector.load %arg2[%c0_19, %c0_20, %c0_21] : memref<1x256x32xbf16, #tpu.memory_space<vmem>>, vector<1x64x32xbf16>
      %39 = vector.shape_cast %38 : vector<1x64x32xbf16> to vector<64x32xbf16>
      %c0_22 = arith.constant 0 : index
      %c0_23 = arith.constant 0 : index
      %40 = vector.load %arg4[%c0_22, %c0_23] : memref<32x4xbf16, #tpu.memory_space<vmem>>, vector<32x4xbf16>
      %cst_24 = arith.constant dense<0.000000e+00> : vector<64x4xf32>
      %41 = tpu.matmul %39, %40, %cst_24 {dimension_numbers = #tpu.dot_dimension_numbers<[1], [0], [0], [1], [0, 0, 1, 1], [], []>} : vector<64x32xbf16>, vector<32x4xbf16>, vector<64x4xf32> -> vector<64x4xf32>
      %c0_25 = arith.constant 0 : index
      %c0_26 = arith.constant 0 : index
      %42 = vector.load %arg5[%c0_25, %c0_26] : memref<32x16xbf16, #tpu.memory_space<vmem>>, vector<32x16xbf16>
      %cst_27 = arith.constant dense<0.000000e+00> : vector<64x16xf32>
      %43 = tpu.matmul %39, %42, %cst_27 {dimension_numbers = #tpu.dot_dimension_numbers<[1], [0], [0], [1], [0, 0, 1, 1], [], []>} : vector<64x32xbf16>, vector<32x16xbf16>, vector<64x16xf32> -> vector<64x16xf32>
      %44 = arith.truncf %41 : vector<64x4xf32> to vector<64x4xbf16>
      %c0_28 = arith.constant 0 : index
      %c0_29 = arith.constant 0 : index
      %45 = vector.load %arg9[%c0_28, %c0_29] : memref<64x4xbf16, #tpu.memory_space<vmem>>, vector<64x4xbf16>
      tpu.vector_store %arg9[%c0_28, %c0_29], %44 {strides = array<i32>} : memref<64x4xbf16, #tpu.memory_space<vmem>>, vector<64x4xbf16>,
      %46 = arith.truncf %43 : vector<64x16xf32> to vector<64x16xbf16>
      %c0_30 = arith.constant 0 : index
      %c0_31 = arith.constant 0 : index
      %47 = vector.load %arg10[%c0_30, %c0_31] : memref<64x17xbf16, #tpu.memory_space<vmem>>, vector<64x16xbf16>
      tpu.vector_store %arg10[%c0_30, %c0_31], %46 {strides = array<i32>} : memref<64x17xbf16, #tpu.memory_space<vmem>>, vector<64x16xbf16>,
      %cst_32 = arith.constant 1.000000e+00 : bf16
      %48 = vector.broadcast %cst_32 : bf16 to vector<64x1xbf16>
      %c0_33 = arith.constant 0 : index
      %c16 = arith.constant 16 : index
      %49 = vector.load %arg10[%c0_33, %c16] : memref<64x17xbf16, #tpu.memory_space<vmem>>, vector<64x1xbf16>
      tpu.vector_store %arg10[%c0_33, %c16], %48 {strides = array<i32>} : memref<64x17xbf16, #tpu.memory_space<vmem>>, vector<64x1xbf16>,
      %c0_34 = arith.constant 0 : index
      %c64 = arith.constant 64 : index
      %c0_35 = arith.constant 0 : index
      %50 = vector.load %arg2[%c0_34, %c64, %c0_35] : memref<1x256x32xbf16, #tpu.memory_space<vmem>>, vector<1x64x32xbf16>
      %51 = vector.shape_cast %50 : vector<1x64x32xbf16> to vector<64x32xbf16>
      %c0_36 = arith.constant 0 : index
      %c0_37 = arith.constant 0 : index
      %52 = vector.load %arg4[%c0_36, %c0_37] : memref<32x4xbf16, #tpu.memory_space<vmem>>, vector<32x4xbf16>
      %cst_38 = arith.constant dense<0.000000e+00> : vector<64x4xf32>
      %53 = tpu.matmul %51, %52, %cst_38 {dimension_numbers = #tpu.dot_dimension_numbers<[1], [0], [0], [1], [0, 0, 1, 1], [], []>} : vector<64x32xbf16>, vector<32x4xbf16>, vector<64x4xf32> -> vector<64x4xf32>
      %c0_39 = arith.constant 0 : index
      %c0_40 = arith.constant 0 : index
      %54 = vector.load %arg5[%c0_39, %c0_40] : memref<32x16xbf16, #tpu.memory_space<vmem>>, vector<32x16xbf16>
      %cst_41 = arith.constant dense<0.000000e+00> : vector<64x16xf32>
      %55 = tpu.matmul %51, %54, %cst_41 {dimension_numbers = #tpu.dot_dimension_numbers<[1], [0], [0], [1], [0, 0, 1, 1], [], []>} : vector<64x32xbf16>, vector<32x16xbf16>, vector<64x16xf32> -> vector<64x16xf32>
      %c0_42 = arith.constant 0 : index
      %c0_43 = arith.constant 0 : index
      %56 = vector.load %arg9[%c0_42, %c0_43] : memref<64x4xbf16, #tpu.memory_space<vmem>>, vector<64x4xbf16>
      %57 = arith.truncf %53 : vector<64x4xf32> to vector<64x4xbf16>
      %58 = arith.maximumf %56, %57 : vector<64x4xbf16>
      %c0_44 = arith.constant 0 : index
      %c0_45 = arith.constant 0 : index
      %59 = vector.load %arg9[%c0_44, %c0_45] : memref<64x4xbf16, #tpu.memory_space<vmem>>, vector<64x4xbf16>
      tpu.vector_store %arg9[%c0_44, %c0_45], %58 {strides = array<i32>} : memref<64x4xbf16, #tpu.memory_space<vmem>>, vector<64x4xbf16>,
      %c0_46 = arith.constant 0 : index
      %c0_47 = arith.constant 0 : index
      %60 = vector.load %arg10[%c0_46, %c0_47] : memref<64x17xbf16, #tpu.memory_space<vmem>>, vector<64x16xbf16>
      %61 = arith.truncf %55 : vector<64x16xf32> to vector<64x16xbf16>
      %62 = arith.maximumf %60, %61 : vector<64x16xbf16>
      %c0_48 = arith.constant 0 : index
      %c0_49 = arith.constant 0 : index
      %63 = vector.load %arg10[%c0_48, %c0_49] : memref<64x17xbf16, #tpu.memory_space<vmem>>, vector<64x16xbf16>
      tpu.vector_store %arg10[%c0_48, %c0_49], %62 {strides = array<i32>} : memref<64x17xbf16, #tpu.memory_space<vmem>>, vector<64x16xbf16>,
      %c0_50 = arith.constant 0 : index
      %c128 = arith.constant 128 : index
      %c0_51 = arith.constant 0 : index
      %64 = vector.load %arg2[%c0_50, %c128, %c0_51] : memref<1x256x32xbf16, #tpu.memory_space<vmem>>, vector<1x64x32xbf16>
      %65 = vector.shape_cast %64 : vector<1x64x32xbf16> to vector<64x32xbf16>
      %c0_52 = arith.constant 0 : index
      %c0_53 = arith.constant 0 : index
      %66 = vector.load %arg4[%c0_52, %c0_53] : memref<32x4xbf16, #tpu.memory_space<vmem>>, vector<32x4xbf16>
      %cst_54 = arith.constant dense<0.000000e+00> : vector<64x4xf32>
      %67 = tpu.matmul %65, %66, %cst_54 {dimension_numbers = #tpu.dot_dimension_numbers<[1], [0], [0], [1], [0, 0, 1, 1], [], []>} : vector<64x32xbf16>, vector<32x4xbf16>, vector<64x4xf32> -> vector<64x4xf32>
      %c0_55 = arith.constant 0 : index
      %c0_56 = arith.constant 0 : index
      %68 = vector.load %arg5[%c0_55, %c0_56] : memref<32x16xbf16, #tpu.memory_space<vmem>>, vector<32x16xbf16>
      %cst_57 = arith.constant dense<0.000000e+00> : vector<64x16xf32>
      %69 = tpu.matmul %65, %68, %cst_57 {dimension_numbers = #tpu.dot_dimension_numbers<[1], [0], [0], [1], [0, 0, 1, 1], [], []>} : vector<64x32xbf16>, vector<32x16xbf16>, vector<64x16xf32> -> vector<64x16xf32>
      %c0_58 = arith.constant 0 : index
      %c0_59 = arith.constant 0 : index
      %70 = vector.load %arg9[%c0_58, %c0_59] : memref<64x4xbf16, #tpu.memory_space<vmem>>, vector<64x4xbf16>
      %71 = arith.truncf %67 : vector<64x4xf32> to vector<64x4xbf16>
      %72 = arith.maximumf %70, %71 : vector<64x4xbf16>
      %c0_60 = arith.constant 0 : index
      %c0_61 = arith.constant 0 : index
      %73 = vector.load %arg9[%c0_60, %c0_61] : memref<64x4xbf16, #tpu.memory_space<vmem>>, vector<64x4xbf16>
      tpu.vector_store %arg9[%c0_60, %c0_61], %72 {strides = array<i32>} : memref<64x4xbf16, #tpu.memory_space<vmem>>, vector<64x4xbf16>,
      %c0_62 = arith.constant 0 : index
      %c0_63 = arith.constant 0 : index
      %74 = vector.load %arg10[%c0_62, %c0_63] : memref<64x17xbf16, #tpu.memory_space<vmem>>, vector<64x16xbf16>
      %75 = arith.truncf %69 : vector<64x16xf32> to vector<64x16xbf16>
      %76 = arith.maximumf %74, %75 : vector<64x16xbf16>
      %c0_64 = arith.constant 0 : index
      %c0_65 = arith.constant 0 : index
      %77 = vector.load %arg10[%c0_64, %c0_65] : memref<64x17xbf16, #tpu.memory_space<vmem>>, vector<64x16xbf16>
      tpu.vector_store %arg10[%c0_64, %c0_65], %76 {strides = array<i32>} : memref<64x17xbf16, #tpu.memory_space<vmem>>, vector<64x16xbf16>,
      %c0_66 = arith.constant 0 : index
      %c192 = arith.constant 192 : index
      %c0_67 = arith.constant 0 : index
      %78 = vector.load %arg2[%c0_66, %c192, %c0_67] : memref<1x256x32xbf16, #tpu.memory_space<vmem>>, vector<1x64x32xbf16>
      %79 = vector.shape_cast %78 : vector<1x64x32xbf16> to vector<64x32xbf16>
      %c0_68 = arith.constant 0 : index
      %c0_69 = arith.constant 0 : index
      %80 = vector.load %arg4[%c0_68, %c0_69] : memref<32x4xbf16, #tpu.memory_space<vmem>>, vector<32x4xbf16>
      %cst_70 = arith.constant dense<0.000000e+00> : vector<64x4xf32>
      %81 = tpu.matmul %79, %80, %cst_70 {dimension_numbers = #tpu.dot_dimension_numbers<[1], [0], [0], [1], [0, 0, 1, 1], [], []>} : vector<64x32xbf16>, vector<32x4xbf16>, vector<64x4xf32> -> vector<64x4xf32>
      %c0_71 = arith.constant 0 : index
      %c0_72 = arith.constant 0 : index
      %82 = vector.load %arg5[%c0_71, %c0_72] : memref<32x16xbf16, #tpu.memory_space<vmem>>, vector<32x16xbf16>
      %cst_73 = arith.constant dense<0.000000e+00> : vector<64x16xf32>
      %83 = tpu.matmul %79, %82, %cst_73 {dimension_numbers = #tpu.dot_dimension_numbers<[1], [0], [0], [1], [0, 0, 1, 1], [], []>} : vector<64x32xbf16>, vector<32x16xbf16>, vector<64x16xf32> -> vector<64x16xf32>
      %c0_74 = arith.constant 0 : index
      %c0_75 = arith.constant 0 : index
      %84 = vector.load %arg9[%c0_74, %c0_75] : memref<64x4xbf16, #tpu.memory_space<vmem>>, vector<64x4xbf16>
      %85 = arith.truncf %81 : vector<64x4xf32> to vector<64x4xbf16>
      %86 = arith.maximumf %84, %85 : vector<64x4xbf16>
      %c0_76 = arith.constant 0 : index
      %c0_77 = arith.constant 0 : index
      %87 = vector.load %arg9[%c0_76, %c0_77] : memref<64x4xbf16, #tpu.memory_space<vmem>>, vector<64x4xbf16>
      tpu.vector_store %arg9[%c0_76, %c0_77], %86 {strides = array<i32>} : memref<64x4xbf16, #tpu.memory_space<vmem>>, vector<64x4xbf16>,
      %c0_78 = arith.constant 0 : index
      %c0_79 = arith.constant 0 : index
      %88 = vector.load %arg10[%c0_78, %c0_79] : memref<64x17xbf16, #tpu.memory_space<vmem>>, vector<64x16xbf16>
      %89 = arith.truncf %83 : vector<64x16xf32> to vector<64x16xbf16>
      %90 = arith.maximumf %88, %89 : vector<64x16xbf16>
      %c0_80 = arith.constant 0 : index
      %c0_81 = arith.constant 0 : index
      %91 = vector.load %arg10[%c0_80, %c0_81] : memref<64x17xbf16, #tpu.memory_space<vmem>>, vector<64x16xbf16>
      tpu.vector_store %arg10[%c0_80, %c0_81], %90 {strides = array<i32>} : memref<64x17xbf16, #tpu.memory_space<vmem>>, vector<64x16xbf16>,
    } else {
    }
    %c128_i32 = arith.constant 128 : i32
    %3 = arith.muli %arg1, %c128_i32 : i32
    %4 = tpu.assume_multiple %3, 128 : i32
    %c0 = arith.constant 0 : index
    %5 = arith.index_cast %4 : i32 to index
    %c0_1 = arith.constant 0 : index
    %6 = vector.load %arg2[%c0, %5, %c0_1] : memref<1x256x32xbf16, #tpu.memory_space<vmem>>, vector<1x128x32xbf16>
    %7 = vector.shape_cast %6 : vector<1x128x32xbf16> to vector<128x32xbf16>
    %c0_2 = arith.constant 0 : index
    %c0_3 = arith.constant 0 : index
    %8 = vector.load %arg3[%c0_2, %c0_3] : memref<32x4xbf16, #tpu.memory_space<vmem>>, vector<32x4xbf16>
    %cst = arith.constant dense<0.000000e+00> : vector<128x4xf32>
    %9 = tpu.matmul %7, %8, %cst {dimension_numbers = #tpu.dot_dimension_numbers<[1], [0], [0], [1], [0, 0, 1, 1], [], []>} : vector<128x32xbf16>, vector<32x4xbf16>, vector<128x4xf32> -> vector<128x4xf32>
    %10 = arith.truncf %9 : vector<128x4xf32> to vector<128x4xbf16>
    %c0_4 = arith.constant 0 : index
    %c0_5 = arith.constant 0 : index
    %11 = vector.load %arg9[%c0_4, %c0_5] : memref<64x4xbf16, #tpu.memory_space<vmem>>, vector<64x4xbf16>
    %cst_6 = arith.constant dense<0.000000e+00> : vector<128x64xf32>
    %12 = tpu.matmul %10, %11, %cst_6 {dimension_numbers = #tpu.dot_dimension_numbers<[1], [1], [0], [0], [0, 0, 1, 0], [], []>} : vector<128x4xbf16>, vector<64x4xbf16>, vector<128x64xf32> -> vector<128x64xf32>
    %cst_7 = arith.constant dense<0xFF800000> : vector<128xf32>
    %13 = vector.multi_reduction <maximumf>, %12, %cst_7 [1] : vector<128x64xf32> to vector<128xf32>
    %14 = vector.shape_cast %13 : vector<128xf32> to vector<128x1xf32>
    %15 = vector.broadcast %14 : vector<128x1xf32> to vector<128x64xf32>
    %16 = arith.subf %12, %15 : vector<128x64xf32>
    %17 = arith.truncf %16 : vector<128x64xf32> to vector<128x64xbf16>
    %18 = math.exp %17 : vector<128x64xbf16>
    %c0_8 = arith.constant 0 : index
    %c0_9 = arith.constant 0 : index
    %19 = vector.load %arg10[%c0_8, %c0_9] : memref<64x17xbf16, #tpu.memory_space<vmem>>, vector<64x17xbf16>
    %cst_10 = arith.constant dense<0.000000e+00> : vector<128x17xf32>
    %20 = tpu.matmul %18, %19, %cst_10 {dimension_numbers = #tpu.dot_dimension_numbers<[1], [0], [0], [1], [0, 0, 1, 1], [], []>} : vector<128x64xbf16>, vector<64x17xbf16>, vector<128x17xf32> -> vector<128x17xf32>
    %21 = vector.extract_strided_slice %20 {offsets = [0, 16], sizes = [128, 1], strides = [1, 1]} : vector<128x17xf32> to vector<128x1xf32>
    %22 = vector.extract_strided_slice %20 {offsets = [0, 0], sizes = [128, 16], strides = [1, 1]} : vector<128x17xf32> to vector<128x16xf32>
    %23 = tpu.reciprocal %21 {approx = true} : vector<128x1xf32> -> vector<128x1xf32>
    %24 = vector.broadcast %23 : vector<128x1xf32> to vector<128x16xf32>
    %25 = arith.mulf %22, %24 : vector<128x16xf32>
    %26 = arith.truncf %25 : vector<128x16xf32> to vector<128x16xbf16>
    %c0_11 = arith.constant 0 : index
    %c0_12 = arith.constant 0 : index
    %27 = vector.load %arg6[%c0_11, %c0_12] : memref<16x32xbf16, #tpu.memory_space<vmem>>, vector<16x32xbf16>
    %cst_13 = arith.constant dense<0.000000e+00> : vector<128x32xf32>
    %28 = tpu.matmul %26, %27, %cst_13 {dimension_numbers = #tpu.dot_dimension_numbers<[1], [0], [0], [1], [0, 0, 1, 1], [], []>} : vector<128x16xbf16>, vector<16x32xbf16>, vector<128x32xf32> -> vector<128x32xf32>
    %c0_14 = arith.constant 0 : index
    %c0_15 = arith.constant 0 : index
    %29 = memref.load %arg7[%c0_14, %c0_15] : memref<1x1xf32, #tpu.memory_space<smem>>
    %30 = vector.broadcast %29 : f32 to vector<128x32xf32>
    %31 = arith.mulf %30, %28 : vector<128x32xf32>
    %32 = arith.extf %7 : vector<128x32xbf16> to vector<128x32xf32>
    %33 = arith.addf %31, %32 : vector<128x32xf32>
    %34 = arith.truncf %33 : vector<128x32xf32> to vector<128x32xbf16>
    %c0_16 = arith.constant 0 : index
    %c0_17 = arith.constant 0 : index
    %c0_18 = arith.constant 0 : index
    %35 = vector.load %arg8[%c0_16, %c0_17, %c0_18] : memref<1x128x32xbf16, #tpu.memory_space<vmem>>, vector<1x128x32xbf16>
    %36 = vector.shape_cast %35 : vector<1x128x32xbf16> to vector<128x32xbf16>
    %37 = vector.shape_cast %34 : vector<128x32xbf16> to vector<1x128x32xbf16>
    tpu.vector_store %arg8[%c0_16, %c0_17, %c0_18], %37 {strides = array<i32>} : memref<1x128x32xbf16, #tpu.memory_space<vmem>>, vector<1x128x32xbf16>,
    return
  }
  func.func @transform_0(%arg0: i32, %arg1: i32) -> (i32, i32, i32) {
    %c0_i32 = arith.constant 0 : i32
    %c0_i32_0 = arith.constant 0 : i32
    %c0_i32_1 = arith.constant 0 : i32
    return %arg0, %c0_i32, %c0_i32_0 : i32, i32, i32
  }
  func.func @transform_1(%arg0: i32, %arg1: i32) -> (i32, i32) {
    %c0_i32 = arith.constant 0 : i32
    %c0_i32_0 = arith.constant 0 : i32
    %c0_i32_1 = arith.constant 0 : i32
    return %c0_i32, %c0_i32_0 : i32, i32
  }
  func.func @transform_2(%arg0: i32, %arg1: i32) -> (i32, i32) {
    %c0_i32 = arith.constant 0 : i32
    %c0_i32_0 = arith.constant 0 : i32
    %c0_i32_1 = arith.constant 0 : i32
    return %c0_i32, %c0_i32_0 : i32, i32
  }
  func.func @transform_3(%arg0: i32, %arg1: i32) -> (i32, i32) {
    %c0_i32 = arith.constant 0 : i32
    %c0_i32_0 = arith.constant 0 : i32
    %c0_i32_1 = arith.constant 0 : i32
    return %c0_i32, %c0_i32_0 : i32, i32
  }
  func.func @transform_4(%arg0: i32, %arg1: i32) -> (i32, i32) {
    %c0_i32 = arith.constant 0 : i32
    %c0_i32_0 = arith.constant 0 : i32
    %c0_i32_1 = arith.constant 0 : i32
    return %c0_i32, %c0_i32_0 : i32, i32
  }
  func.func @transform_5(%arg0: i32, %arg1: i32) -> (i32, i32) {
    %c0_i32 = arith.constant 0 : i32
    %c0_i32_0 = arith.constant 0 : i32
    %c0_i32_1 = arith.constant 0 : i32
    return %c0_i32, %c0_i32_0 : i32, i32
  }
  func.func @transform_6(%arg0: i32, %arg1: i32) -> (i32, i32, i32) {
    %c0_i32 = arith.constant 0 : i32
    %c0_i32_0 = arith.constant 0 : i32
    return %arg0, %arg1, %c0_i32 : i32, i32, i32
  }
}

</mosaic_0001>

<llo_original>
// kernel: tpu_custom_call.1
$region0: #{tpu_custom_call.1}
  #allocation0 [shape = 'u32[]', space=smem, size = 0x4, offset = 0x4, fixed_abs, tag = 'smem constant byte address 0x4 - core index']
  #allocation1 [shape = 'u32[144,128]{1,0:T(1,128)}', space=vmem, size = 0x12000, scoped, tag = 'internal scratch']
  #allocation2 [shape = 'bf16[64,4]{1,0:T(16,128)(2,1)}', space=vmem, size = 0x4000, scoped, tag = 'scratch operand']
  #allocation3 [shape = 'bf16[64,17]{1,0:T(16,128)(2,1)}', space=vmem, size = 0x4000, scoped, tag = 'scratch operand']
  #allocation4 [shape = 'f32[1,1]{1,0:T(1,128)S(6)}', space=smem, size = 0x200, scoped, tag = 'scoped memory for tpu_custom_call.1']
  %s0 = inlined_call_operand.vmem [shape: bf16[2,256,32], index: 0, kind: input, shape index: {}]
  %s1 = inlined_call_operand.vmem [shape: bf16[32,4], index: 1, kind: input, shape index: {}]
  %s2 = inlined_call_operand.vmem [shape: bf16[32,4], index: 2, kind: input, shape index: {}]
  %s3 = inlined_call_operand.vmem [shape: bf16[32,16], index: 3, kind: input, shape index: {}]
  %s4 = inlined_call_operand.vmem [shape: bf16[16,32], index: 4, kind: input, shape index: {}]
  %s5 = inlined_call_operand.<no memory space> [shape: f32[1,1], index: 5, kind: input, shape index: {}]
  %s6 = inlined_call_operand.vmem [shape: bf16[2,256,32], index: 6, kind: output, shape index: {}]
  %s7 = sld [smem:[#allocation0]]
  $region61: #{tpu_custom_call.1} parent=0
    _
  %s9 = ssub.s32 1, %s7
  %s10 = scalar_select 0, %s9, %s7
  %11 = sst [smem:[#allocation4]] %s5
  loop: start=0, step=1, limit=6
  $region2: #{tpu_custom_call.1} parent=0 // loop_pre_header
    _
  $region3: #{tpu_custom_call.1} parent=0 // loop_header
    %s13 = sphi 0, %s17
    %p14 = scmp.ge.s32.totalorder %s13, 6
    %s20 = sphi 0, %s32
    %s21 = sphi 0, %s28
    %s22 = sphi 0, %s20
    %s23 = sphi 0, %s21
    %s24 = sphi 0, %s22
    %s25 = sphi 0, %s23
    %s35 = sphi 0, %s37
    %s38 = sphi 0, %s35
    %s39 = sphi 0, %s38
    %s55 = sphi 0, %s39
    %s59 = sphi 0, %s59
    %s61 = sphi 0, %s59
    %s62 = sphi 0, %s61
    %s76 = sphi 0, %s62
    %s80 = sphi 0, %s80
    %s82 = sphi 0, %s80
    %s83 = sphi 0, %s82
    %s97 = sphi 0, %s83
    %s101 = sphi 0, %s101
    %s103 = sphi 0, %s101
    %s104 = sphi 0, %s103
    %s118 = sphi 0, %s104
    %s122 = sphi 0, %s122
    %s124 = sphi 0, %s122
    %s125 = sphi 0, %s124
    %s139 = sphi 0, %s125
    %s143 = sphi 0, %s143
    %s145 = sphi 0, %s143
    %s146 = sphi 0, %s145
    %s160 = sphi 0, %s146
    %s168 = sphi 0, %s170
    %s171 = sphi 0, %s168
    %s172 = sphi 0, %s171
    %s188 = sphi 0, %s172
  $region4: #{tpu_custom_call.1} parent=0 // loop_header_branch
    %16 = sbr.rel (%p14) target = $region8
  $region5: #{tpu_custom_call.1} parent=0 // loop_body
    %s18 = ssub.s32 %s13, 1
    %s19 = ssub.s32 %s13, 2
    %s26 = sadd.s32 1, %s21
    %p27 = scmp.ge.s32.totalorder %s26, 2
    %s28 = scalar_select %p27, 0, %s26
    %s29 = sadd.s32 1, %s20
    %s30 = scalar_select %p27, %s29, %s20
    %p31 = scmp.ge.s32.totalorder %s30, 2
    %s32 = scalar_select %p31, 0, %s30
    %s33 = ssub.s32 %s20, %s32
    %p34 = scmp.eq.s32.totalorder %s33, 0
    %s36 = sadd.s32 %s35, 1
    %s37 = scalar_select %p34, %s35, %s36
    %p40 = pneg %p34
    %p41 = scmp.eq.s32.totalorder %s13, 3
    %p42 = por %p40, %p41
    %p43 = scmp.ne.s32.totalorder %s35, %s38
    %p44 = scmp.eq.s32.totalorder %s13, 0
    %p45 = por %p43, %p44
    %p46 = scmp.ne.s32.totalorder %s35, %s38
    %p47 = scmp.eq.s32.totalorder %s18, 3
    %p48 = por %p46, %p47
    %p49 = scmp.ne.s32.totalorder %s38, %s39
    %p50 = scmp.eq.s32.totalorder %s18, 0
    %p51 = por %p49, %p50
    %p52 = scmp.ne.s32.totalorder %s38, %s39
    %p53 = scmp.eq.s32.totalorder %s19, 3
    %p54 = por %p52, %p53
    %p56 = scmp.ne.s32.totalorder %s39, %s55
    %p57 = scmp.eq.s32.totalorder %s19, 0
    %p58 = por %p56, %p57
    %s60 = sadd.s32 %s59, 1
    %p63 = scmp.eq.s32.totalorder %s13, 3
    %p64 = scmp.ne.s32.totalorder %s59, %s61
    %p65 = scmp.eq.s32.totalorder %s13, 0
    %p66 = por %p64, %p65
    %p67 = scmp.ne.s32.totalorder %s59, %s61
    %p68 = scmp.eq.s32.totalorder %s18, 3
    %p69 = por %p67, %p68
    %p70 = scmp.ne.s32.totalorder %s61, %s62
    %p71 = scmp.eq.s32.totalorder %s18, 0
    %p72 = por %p70, %p71
    %p73 = scmp.ne.s32.totalorder %s61, %s62
    %p74 = scmp.eq.s32.totalorder %s19, 3
    %p75 = por %p73, %p74
    %p77 = scmp.ne.s32.totalorder %s62, %s76
    %p78 = scmp.eq.s32.totalorder %s19, 0
    %p79 = por %p77, %p78
    %s81 = sadd.s32 %s80, 1
    %p84 = scmp.eq.s32.totalorder %s13, 3
    %p85 = scmp.ne.s32.totalorder %s80, %s82
    %p86 = scmp.eq.s32.totalorder %s13, 0
    %p87 = por %p85, %p86
    %p88 = scmp.ne.s32.totalorder %s80, %s82
    %p89 = scmp.eq.s32.totalorder %s18, 3
    %p90 = por %p88, %p89
    %p91 = scmp.ne.s32.totalorder %s82, %s83
    %p92 = scmp.eq.s32.totalorder %s18, 0
    %p93 = por %p91, %p92
    %p94 = scmp.ne.s32.totalorder %s82, %s83
    %p95 = scmp.eq.s32.totalorder %s19, 3
    %p96 = por %p94, %p95
    %p98 = scmp.ne.s32.totalorder %s83, %s97
    %p99 = scmp.eq.s32.totalorder %s19, 0
    %p100 = por %p98, %p99
    %s102 = sadd.s32 %s101, 1
    %p105 = scmp.eq.s32.totalorder %s13, 3
    %p106 = scmp.ne.s32.totalorder %s101, %s103
    %p107 = scmp.eq.s32.totalorder %s13, 0
    %p108 = por %p106, %p107
    %p109 = scmp.ne.s32.totalorder %s101, %s103
    %p110 = scmp.eq.s32.totalorder %s18, 3
    %p111 = por %p109, %p110
    %p112 = scmp.ne.s32.totalorder %s103, %s104
    %p113 = scmp.eq.s32.totalorder %s18, 0
    %p114 = por %p112, %p113
    %p115 = scmp.ne.s32.totalorder %s103, %s104
    %p116 = scmp.eq.s32.totalorder %s19, 3
    %p117 = por %p115, %p116
    %p119 = scmp.ne.s32.totalorder %s104, %s118
    %p120 = scmp.eq.s32.totalorder %s19, 0
    %p121 = por %p119, %p120
    %s123 = sadd.s32 %s122, 1
    %p126 = scmp.eq.s32.totalorder %s13, 3
    %p127 = scmp.ne.s32.totalorder %s122, %s124
    %p128 = scmp.eq.s32.totalorder %s13, 0
    %p129 = por %p127, %p128
    %p130 = scmp.ne.s32.totalorder %s122, %s124
    %p131 = scmp.eq.s32.totalorder %s18, 3
    %p132 = por %p130, %p131
    %p133 = scmp.ne.s32.totalorder %s124, %s125
    %p134 = scmp.eq.s32.totalorder %s18, 0
    %p135 = por %p133, %p134
    %p136 = scmp.ne.s32.totalorder %s124, %s125
    %p137 = scmp.eq.s32.totalorder %s19, 3
    %p138 = por %p136, %p137
    %p140 = scmp.ne.s32.totalorder %s125, %s139
    %p141 = scmp.eq.s32.totalorder %s19, 0
    %p142 = por %p140, %p141
    %s144 = sadd.s32 %s143, 1
    %p147 = scmp.eq.s32.totalorder %s13, 3
    %p148 = scmp.ne.s32.totalorder %s143, %s145
    %p149 = scmp.eq.s32.totalorder %s13, 0
    %p150 = por %p148, %p149
    %p151 = scmp.ne.s32.totalorder %s143, %s145
    %p152 = scmp.eq.s32.totalorder %s18, 3
    %p153 = por %p151, %p152
    %p154 = scmp.ne.s32.totalorder %s145, %s146
    %p155 = scmp.eq.s32.totalorder %s18, 0
    %p156 = por %p154, %p155
    %p157 = scmp.ne.s32.totalorder %s145, %s146
    %p158 = scmp.eq.s32.totalorder %s19, 3
    %p159 = por %p157, %p158
    %p161 = scmp.ne.s32.totalorder %s146, %s160
    %p162 = scmp.eq.s32.totalorder %s19, 0
    %p163 = por %p161, %p162
    %s164 = ssub.s32 %s20, %s32
    %s165 = ssub.s32 %s21, %s28
    %s166 = sor.u32 %s164, %s165
    %p167 = scmp.eq.s32.totalorder %s166, 0
    %s169 = sadd.s32 %s168, 1
    %s170 = scalar_select %p167, %s168, %s169
    %p173 = pneg %p167
    %p174 = scmp.eq.s32.totalorder %s13, 3
    %p175 = por %p173, %p174
    %p176 = scmp.ne.s32.totalorder %s168, %s171
    %p177 = scmp.eq.s32.totalorder %s13, 0
    %p178 = por %p176, %p177
    %p179 = scmp.ne.s32.totalorder %s168, %s171
    %p180 = scmp.eq.s32.totalorder %s18, 3
    %p181 = por %p179, %p180
    %p182 = scmp.ne.s32.totalorder %s171, %s172
    %p183 = scmp.eq.s32.totalorder %s18, 0
    %p184 = por %p182, %p183
    %p185 = scmp.ne.s32.totalorder %s171, %s172
    %p186 = scmp.eq.s32.totalorder %s19, 3
    %p187 = por %p185, %p186
    %p189 = scmp.ne.s32.totalorder %s172, %s188
    %p190 = scmp.eq.s32.totalorder %s19, 0
    %p191 = por %p189, %p190
    %p192 = scmp.le.s32.totalorder 1, %s13
    %p193 = scmp.lt.s32.totalorder %s13, 5
    %p194 = pnand %p192, %p193
    %p195 = pneg %p194
    // Predicated region
    $region9: #{tpu_custom_call.1} parent=5 // pred_check
      _
    $region10: #{tpu_custom_call.1} parent=5 // pred_check_branch
      %197 = sbr.rel (%p194) target = $region12
    $region11: #{tpu_custom_call.1} parent=5 // pred_region
      %s198 = ssub.s32 %s13, 1
      // Predicated region
      $region13: #{tpu_custom_call.1} parent=11 // pred_check
        %p199 = pneg %p72
      $region14: #{tpu_custom_call.1} parent=11 // pred_check_branch
        %201 = sbr.rel (%p199) target = $region16
      $region15: #{tpu_custom_call.1} parent=11 // pred_region
        _
      $region16: #{tpu_custom_call.1} parent=11 // pred_fallthru
        _
      // Predicated region
      $region17: #{tpu_custom_call.1} parent=11 // pred_check
        %p202 = pneg %p93
      $region18: #{tpu_custom_call.1} parent=11 // pred_check_branch
        %204 = sbr.rel (%p202) target = $region20
      $region19: #{tpu_custom_call.1} parent=11 // pred_region
        _
      $region20: #{tpu_custom_call.1} parent=11 // pred_fallthru
        _
      // Predicated region
      $region21: #{tpu_custom_call.1} parent=11 // pred_check
        %p205 = pneg %p114
      $region22: #{tpu_custom_call.1} parent=11 // pred_check_branch
        %207 = sbr.rel (%p205) target = $region24
      $region23: #{tpu_custom_call.1} parent=11 // pred_region
        _
      $region24: #{tpu_custom_call.1} parent=11 // pred_fallthru
        _
      // Predicated region
      $region25: #{tpu_custom_call.1} parent=11 // pred_check
        %p208 = pneg %p135
      $region26: #{tpu_custom_call.1} parent=11 // pred_check_branch
        %210 = sbr.rel (%p208) target = $region28
      $region27: #{tpu_custom_call.1} parent=11 // pred_region
        _
      $region28: #{tpu_custom_call.1} parent=11 // pred_fallthru
        _
      // Predicated region
      $region29: #{tpu_custom_call.1} parent=11 // pred_check
        %p211 = pneg %p156
      $region30: #{tpu_custom_call.1} parent=11 // pred_check_branch
        %213 = sbr.rel (%p211) target = $region32
      $region31: #{tpu_custom_call.1} parent=11 // pred_region
        _
      $region32: #{tpu_custom_call.1} parent=11 // pred_fallthru
        _
    $region12: #{tpu_custom_call.1} parent=5 // pred_fallthru
      _
    %p214 = scmp.lt.s32.totalorder %s13, 4
    // Predicated region
    $region33: #{tpu_custom_call.1} parent=5 // pred_check
      %p215 = pneg %p214
    $region34: #{tpu_custom_call.1} parent=5 // pred_check_branch
      %217 = sbr.rel (%p215) target = $region36
    $region35: #{tpu_custom_call.1} parent=5 // pred_region
      // Predicated region
      $region37: #{tpu_custom_call.1} parent=35 // pred_check
        %p218 = pneg %p45
      $region38: #{tpu_custom_call.1} parent=35 // pred_check_branch
        %220 = sbr.rel (%p218) target = $region40
      $region39: #{tpu_custom_call.1} parent=35 // pred_region
        %p221 = scmp.lt.s32.totalorder %s20, 1
        %s222 = scalar_select %p221, %s20, 1
        %s223 = smul.addr %s222, 32
        %s224 = smul.addr %s223, 4
        %s225 = scalar_lea.vmem %s0, %s224
      $region40: #{tpu_custom_call.1} parent=35 // pred_fallthru
        _
    $region36: #{tpu_custom_call.1} parent=5 // pred_fallthru
      _
    %p226 = scmp.le.s32.totalorder 1, %s13
    %p227 = scmp.lt.s32.totalorder %s13, 5
    %p228 = pnand %p226, %p227
    %p229 = pneg %p228
    // Predicated region
    $region41: #{tpu_custom_call.1} parent=5 // pred_check
      _
    $region42: #{tpu_custom_call.1} parent=5 // pred_check_branch
      %231 = sbr.rel (%p228) target = $region44
    $region43: #{tpu_custom_call.1} parent=5 // pred_region
      %s232 = ssub.s32 %s13, 1
      %p233 = scmp.lt.s32.totalorder %s22, 1
      %s234 = scalar_select %p233, %s22, 1
      %s235 = smul.addr %s234, 32
      %s236 = smul.addr %s235, 4
      %s237 = scalar_lea.vmem %s0, %s236
      %p238 = pneg %p51
      %p239 = pneg %p48
      %p240 = pneg %p72
      %p241 = pneg %p69
      %p242 = pneg %p93
      %p243 = pneg %p90
      %p244 = pneg %p114
      %p245 = pneg %p111
      %p246 = pneg %p135
      %p247 = pneg %p132
      %p248 = pneg %p156
      %p249 = pneg %p153
      %p250 = pneg %p184
      %p251 = pneg %p181
      %s252 = smul.u32 16, %s23
      %p253 = scmp.lt.s32.totalorder %s22, 1
      %s254 = scalar_select %p253, %s22, 1
      %p255 = scmp.lt.s32.totalorder %s252, 31
      %s256 = scalar_select %p255, %s252, 31
      %s257 = smul.addr %s254, 32
      %s258 = sadd.s32 %s256, %s257
      %s259 = smul.addr %s258, 4
      %s260 = scalar_lea.vmem %s6, %s259
      %p261 = scmp.lt.s32.totalorder %s22, 1
      %s262 = scalar_select %p261, %s22, 1
      %s263 = smul.addr %s262, 32
      %s264 = smul.addr %s263, 4
      %s265 = scalar_lea.vmem %s0, %s264
      %s266 = smul.u32 16, %s23
      %p267 = scmp.lt.s32.totalorder %s22, 1
      %s268 = scalar_select %p267, %s22, 1
      %p269 = scmp.lt.s32.totalorder %s266, 31
      %s270 = scalar_select %p269, %s266, 31
      %s271 = smul.addr %s268, 32
      %s272 = sadd.s32 %s270, %s271
      %s273 = smul.addr %s272, 4
      %s274 = scalar_lea.vmem %s6, %s273
      %s275 = smul.u32 16, %s23
      %p278 = scmp.eq.s32.totalorder %s23, 0
      // Predicated region
      $region45: #{tpu_custom_call.1} parent=43 // pred_check
        %p279 = pneg %p278
      $region46: #{tpu_custom_call.1} parent=43 // pred_check_branch
        %281 = sbr.rel (%p279) target = $region48
      $region47: #{tpu_custom_call.1} parent=43 // pred_region
        %v282 = vld [vmem:[%s265] sm:$0xf]
        %v283 = vld [vmem:[%s265 + $0x4] sm:$0xf]
        %v284 = vld [vmem:[%s265 + $0x8] sm:$0xf]
        %v285 = vld [vmem:[%s265 + $0xc] sm:$0xf]
        %v286 = vld [vmem:[%s265 + $0x10] sm:$0xf]
        %v287 = vld [vmem:[%s265 + $0x14] sm:$0xf]
        %v288 = vld [vmem:[%s265 + $0x18] sm:$0xf]
        %v289 = vld [vmem:[%s265 + $0x1c] sm:$0xf]
        %v290 = vld [vmem:[%s2] sm:$0xf]
        %v291 = vld [vmem:[%s2 + $0x4] sm:$0xf]
        %v292 = vld [vmem:[%s2 + $0x8] sm:$0xf]
        %v293 = vld [vmem:[%s2 + $0xc] sm:$0xf]
        %v302 = vunpack.c.l.b16 %v282
        %v303 = vunpack.c.l.b16 %v283
        %v304 = vunpack.c.l.b16 %v284
        %v305 = vunpack.c.l.b16 %v285
        %v306 = vunpack.c.l.b16 %v286
        %v307 = vunpack.c.l.b16 %v287
        %v308 = vunpack.c.l.b16 %v288
        %v309 = vunpack.c.l.b16 %v289
        %v310 = vpack.c.b16 %v303, %v302
        %v311 = vpack.c.b16 %v305, %v304
        %v312 = vpack.c.b16 %v307, %v306
        %v313 = vpack.c.b16 %v309, %v308
        %v318 = vunpack.c.l.b16 %v290
        %v319 = vunpack.c.l.b16 %v291
        %v320 = vunpack.c.l.b16 %v292
        %v321 = vunpack.c.l.b16 %v293
        %v322 = vpack.c.b16 %v319, %v318
        %v323 = vpack.c.b16 %v321, %v320
        %vm326 = vcmask 261120
        %v328 = vsel %vm326, %v310, 0
        %v331 = vsel %vm326, %v311, 0
        %v334 = vsel %vm326, %v312, 0
        %v337 = vsel %vm326, %v313, 0
        %339 = vmatprep.subr.bf16.mxu0 0
        %340 = vmatpush1.bf16.msra.mxu0 %v322
        %341 = vmatprep.subr.bf16.mxu0 0
        %342 = vmatpush1.bf16.msra.mxu0 %v323
        %343 = vmatprep.subr.bf16.mxu0 0
        %344 = vmatpush1.bf16.msra.mxu0 0
        %345 = vmatprep.subr.bf16.mxu0 0
        %346 = vmatpush1.bf16.msra.mxu0 0
        %347 = vmatprep.subr.bf16.mxu0 0
        %348 = vmatpush1.bf16.msra.mxu0 0
        %349 = vmatprep.subr.bf16.mxu0 0
        %350 = vmatpush1.bf16.msra.mxu0 0
        %351 = vmatprep.subr.bf16.mxu0 0
        %352 = vmatpush1.bf16.msra.mxu0 0
        %353 = vmatprep.subr.bf16.mxu0 0
        %354 = vmatpush1.bf16.msra.mxu0 0
        %355 = vmatprep.subr.bf16.mxu0 0
        %356 = vmatpush1.bf16.msra.mxu0 0
        %357 = vmatprep.subr.bf16.mxu0 0
        %358 = vmatpush1.bf16.msra.mxu0 0
        %359 = vmatprep.subr.bf16.mxu0 0
        %360 = vmatpush1.bf16.msra.mxu0 0
        %361 = vmatprep.subr.bf16.mxu0 0
        %362 = vmatpush1.bf16.msra.mxu0 0
        %363 = vmatprep.subr.bf16.mxu0 0
        %364 = vmatpush1.bf16.msra.mxu0 0
        %365 = vmatprep.subr.bf16.mxu0 0
        %366 = vmatpush1.bf16.msra.mxu0 0
        %367 = vmatprep.subr.bf16.mxu0 0
        %368 = vmatpush1.bf16.msra.mxu0 0
        %369 = vmatprep.subr.bf16.mxu0 0
        %370 = vmatpush1.bf16.msra.mxu0 0
        %371 = vmatprep.mubr.bf16.mxu0 0
        %372 = vmatmul.mubr.bf16.gmra.mrb[0].mxu0 %v328
        %v373 = vpop.f32.mrb[0].mxu0
        %v374 = vadd.f32 0.0, %v373
        %v375 = vpop.f32.mrb[0].mxu0
        %v376 = vpop.f32.mrb[0].mxu0
        %v377 = vadd.f32 0.0, %v376
        %v378 = vpop.f32.mrb[0].mxu0
        %379 = vmatprep.mubr.bf16.mxu0 0
        %380 = vmatmul.mubr.bf16.gmra.mrb[0].mxu0 %v331
        %v381 = vpop.f32.mrb[0].mxu0
        %v382 = vadd.f32 0.0, %v381
        %v383 = vpop.f32.mrb[0].mxu0
        %v384 = vpop.f32.mrb[0].mxu0
        %v385 = vadd.f32 0.0, %v384
        %v386 = vpop.f32.mrb[0].mxu0
        %387 = vmatprep.mubr.bf16.mxu0 0
        %388 = vmatmul.mubr.bf16.gmra.mrb[0].mxu0 %v334
        %v389 = vpop.f32.mrb[0].mxu0
        %v390 = vadd.f32 0.0, %v389
        %v391 = vpop.f32.mrb[0].mxu0
        %v392 = vpop.f32.mrb[0].mxu0
        %v393 = vadd.f32 0.0, %v392
        %v394 = vpop.f32.mrb[0].mxu0
        %395 = vmatprep.mubr.bf16.mxu0 0
        %396 = vmatmul.mubr.bf16.gmra.mrb[0].mxu0 %v337
        %v397 = vpop.f32.mrb[0].mxu0
        %v398 = vadd.f32 0.0, %v397
        %v399 = vpop.f32.mrb[0].mxu0
        %v400 = vpop.f32.mrb[0].mxu0
        %v401 = vadd.f32 0.0, %v400
        %v402 = vpop.f32.mrb[0].mxu0
        %403 = vdwg.mxu0
        %v404 = vld [vmem:[%s3] sm:$0xf]
        %v405 = vld [vmem:[%s3 + $0x4] sm:$0xf]
        %v406 = vld [vmem:[%s3 + $0x8] sm:$0xf]
        %v407 = vld [vmem:[%s3 + $0xc] sm:$0xf]
        %v412 = vunpack.c.l.b16 %v404
        %v413 = vunpack.c.l.b16 %v405
        %v414 = vunpack.c.l.b16 %v406
        %v415 = vunpack.c.l.b16 %v407
        %v416 = vpack.c.b16 %v413, %v412
        %v417 = vpack.c.b16 %v415, %v414
        %420 = vmatprep.subr.bf16.mxu0 0
        %421 = vmatpush1.bf16.msra.mxu0 %v416
        %422 = vmatprep.subr.bf16.mxu0 0
        %423 = vmatpush1.bf16.msra.mxu0 %v417
        %424 = vmatprep.subr.bf16.mxu0 0
        %425 = vmatpush1.bf16.msra.mxu0 0
        %426 = vmatprep.subr.bf16.mxu0 0
        %427 = vmatpush1.bf16.msra.mxu0 0
        %428 = vmatprep.subr.bf16.mxu0 0
        %429 = vmatpush1.bf16.msra.mxu0 0
        %430 = vmatprep.subr.bf16.mxu0 0
        %431 = vmatpush1.bf16.msra.mxu0 0
        %432 = vmatprep.subr.bf16.mxu0 0
        %433 = vmatpush1.bf16.msra.mxu0 0
        %434 = vmatprep.subr.bf16.mxu0 0
        %435 = vmatpush1.bf16.msra.mxu0 0
        %436 = vmatprep.subr.bf16.mxu0 0
        %437 = vmatpush1.bf16.msra.mxu0 0
        %438 = vmatprep.subr.bf16.mxu0 0
        %439 = vmatpush1.bf16.msra.mxu0 0
        %440 = vmatprep.subr.bf16.mxu0 0
        %441 = vmatpush1.bf16.msra.mxu0 0
        %442 = vmatprep.subr.bf16.mxu0 0
        %443 = vmatpush1.bf16.msra.mxu0 0
        %444 = vmatprep.subr.bf16.mxu0 0
        %445 = vmatpush1.bf16.msra.mxu0 0
        %446 = vmatprep.subr.bf16.mxu0 0
        %447 = vmatpush1.bf16.msra.mxu0 0
        %448 = vmatprep.subr.bf16.mxu0 0
        %449 = vmatpush1.bf16.msra.mxu0 0
        %450 = vmatprep.subr.bf16.mxu0 0
        %451 = vmatpush1.bf16.msra.mxu0 0
        %452 = vmatprep.mubr.bf16.mxu0 0
        %453 = vmatmul.mubr.bf16.gmra.mrb[0].mxu0 %v328
        %v454 = vpop.f32.mrb[0].mxu0
        %v455 = vadd.f32 0.0, %v454
        %v456 = vpop.f32.mrb[0].mxu0
        %v457 = vpop.f32.mrb[0].mxu0
        %v458 = vadd.f32 0.0, %v457
        %v459 = vpop.f32.mrb[0].mxu0
        %460 = vmatprep.mubr.bf16.mxu0 0
        %461 = vmatmul.mubr.bf16.gmra.mrb[0].mxu0 %v331
        %v462 = vpop.f32.mrb[0].mxu0
        %v463 = vadd.f32 0.0, %v462
        %v464 = vpop.f32.mrb[0].mxu0
        %v465 = vpop.f32.mrb[0].mxu0
        %v466 = vadd.f32 0.0, %v465
        %v467 = vpop.f32.mrb[0].mxu0
        %468 = vmatprep.mubr.bf16.mxu0 0
        %469 = vmatmul.mubr.bf16.gmra.mrb[0].mxu0 %v334
        %v470 = vpop.f32.mrb[0].mxu0
        %v471 = vadd.f32 0.0, %v470
        %v472 = vpop.f32.mrb[0].mxu0
        %v473 = vpop.f32.mrb[0].mxu0
        %v474 = vadd.f32 0.0, %v473
        %v475 = vpop.f32.mrb[0].mxu0
        %476 = vmatprep.mubr.bf16.mxu0 0
        %477 = vmatmul.mubr.bf16.gmra.mrb[0].mxu0 %v337
        %v478 = vpop.f32.mrb[0].mxu0
        %v479 = vadd.f32 0.0, %v478
        %v480 = vpop.f32.mrb[0].mxu0
        %v481 = vpop.f32.mrb[0].mxu0
        %v482 = vadd.f32 0.0, %v481
        %v483 = vpop.f32.mrb[0].mxu0
        %484 = vdwg.mxu0
        %v485 = vpack.c.bf16 %v377, %v374
        %v486 = vpack.c.bf16 %v385, %v382
        %v487 = vpack.c.bf16 %v393, %v390
        %v488 = vpack.c.bf16 %v401, %v398
        %vm489 = vcmask 31744
        %490 = vst.msk [vmem:[#allocation2] sm:$0xff] %vm489, %v485
        %491 = vst.msk [vmem:[#allocation2 + $0x8] sm:$0xff] %vm489, %v486
        %492 = vst.msk [vmem:[#allocation2 + $0x10] sm:$0xff] %vm489, %v487
        %493 = vst.msk [vmem:[#allocation2 + $0x18] sm:$0xff] %vm489, %v488
        %v494 = vpack.c.bf16 %v458, %v455
        %v495 = vpack.c.bf16 %v466, %v463
        %v496 = vpack.c.bf16 %v474, %v471
        %v497 = vpack.c.bf16 %v482, %v479
        %vm498 = vcmask 130048
        %499 = vst.msk [vmem:[#allocation3] sm:$0xff] %vm498, %v494
        %500 = vst.msk [vmem:[#allocation3 + $0x8] sm:$0xff] %vm498, %v495
        %501 = vst.msk [vmem:[#allocation3 + $0x10] sm:$0xff] %vm498, %v496
        %502 = vst.msk [vmem:[#allocation3 + $0x18] sm:$0xff] %vm498, %v497
        %vm503 = vcmask 138368
        %504 = vst.msk [vmem:[#allocation3] sm:$0xff] %vm503, 1065369472
        %505 = vst.msk [vmem:[#allocation3 + $0x8] sm:$0xff] %vm503, 1065369472
        %506 = vst.msk [vmem:[#allocation3 + $0x10] sm:$0xff] %vm503, 1065369472
        %507 = vst.msk [vmem:[#allocation3 + $0x18] sm:$0xff] %vm503, 1065369472
        %v508 = vld [vmem:[%s265 + $0x20] sm:$0xf]
        %v509 = vld [vmem:[%s265 + $0x24] sm:$0xf]
        %v510 = vld [vmem:[%s265 + $0x28] sm:$0xf]
        %v511 = vld [vmem:[%s265 + $0x2c] sm:$0xf]
        %v512 = vld [vmem:[%s265 + $0x30] sm:$0xf]
        %v513 = vld [vmem:[%s265 + $0x34] sm:$0xf]
        %v514 = vld [vmem:[%s265 + $0x38] sm:$0xf]
        %v515 = vld [vmem:[%s265 + $0x3c] sm:$0xf]
        %v516 = vld [vmem:[%s2] sm:$0xf]
        %v517 = vld [vmem:[%s2 + $0x4] sm:$0xf]
        %v518 = vld [vmem:[%s2 + $0x8] sm:$0xf]
        %v519 = vld [vmem:[%s2 + $0xc] sm:$0xf]
        %v528 = vunpack.c.l.b16 %v508
        %v529 = vunpack.c.l.b16 %v509
        %v530 = vunpack.c.l.b16 %v510
        %v531 = vunpack.c.l.b16 %v511
        %v532 = vunpack.c.l.b16 %v512
        %v533 = vunpack.c.l.b16 %v513
        %v534 = vunpack.c.l.b16 %v514
        %v535 = vunpack.c.l.b16 %v515
        %v536 = vpack.c.b16 %v529, %v528
        %v537 = vpack.c.b16 %v531, %v530
        %v538 = vpack.c.b16 %v533, %v532
        %v539 = vpack.c.b16 %v535, %v534
        %v544 = vunpack.c.l.b16 %v516
        %v545 = vunpack.c.l.b16 %v517
        %v546 = vunpack.c.l.b16 %v518
        %v547 = vunpack.c.l.b16 %v519
        %v548 = vpack.c.b16 %v545, %v544
        %v549 = vpack.c.b16 %v547, %v546
        %v553 = vsel %vm326, %v536, 0
        %v556 = vsel %vm326, %v537, 0
        %v559 = vsel %vm326, %v538, 0
        %v562 = vsel %vm326, %v539, 0
        %564 = vmatprep.subr.bf16.mxu0 0
        %565 = vmatpush1.bf16.msra.mxu0 %v548
        %566 = vmatprep.subr.bf16.mxu0 0
        %567 = vmatpush1.bf16.msra.mxu0 %v549
        %568 = vmatprep.subr.bf16.mxu0 0
        %569 = vmatpush1.bf16.msra.mxu0 0
        %570 = vmatprep.subr.bf16.mxu0 0
        %571 = vmatpush1.bf16.msra.mxu0 0
        %572 = vmatprep.subr.bf16.mxu0 0
        %573 = vmatpush1.bf16.msra.mxu0 0
        %574 = vmatprep.subr.bf16.mxu0 0
        %575 = vmatpush1.bf16.msra.mxu0 0
        %576 = vmatprep.subr.bf16.mxu0 0
        %577 = vmatpush1.bf16.msra.mxu0 0
        %578 = vmatprep.subr.bf16.mxu0 0
        %579 = vmatpush1.bf16.msra.mxu0 0
        %580 = vmatprep.subr.bf16.mxu0 0
        %581 = vmatpush1.bf16.msra.mxu0 0
        %582 = vmatprep.subr.bf16.mxu0 0
        %583 = vmatpush1.bf16.msra.mxu0 0
        %584 = vmatprep.subr.bf16.mxu0 0
        %585 = vmatpush1.bf16.msra.mxu0 0
        %586 = vmatprep.subr.bf16.mxu0 0
        %587 = vmatpush1.bf16.msra.mxu0 0
        %588 = vmatprep.subr.bf16.mxu0 0
        %589 = vmatpush1.bf16.msra.mxu0 0
        %590 = vmatprep.subr.bf16.mxu0 0
        %591 = vmatpush1.bf16.msra.mxu0 0
        %592 = vmatprep.subr.bf16.mxu0 0
        %593 = vmatpush1.bf16.msra.mxu0 0
        %594 = vmatprep.subr.bf16.mxu0 0
        %595 = vmatpush1.bf16.msra.mxu0 0
        %596 = vmatprep.mubr.bf16.mxu0 0
        %597 = vmatmul.mubr.bf16.gmra.mrb[0].mxu0 %v553
        %v598 = vpop.f32.mrb[0].mxu0
        %v599 = vadd.f32 0.0, %v598
        %v600 = vpop.f32.mrb[0].mxu0
        %v601 = vpop.f32.mrb[0].mxu0
        %v602 = vadd.f32 0.0, %v601
        %v603 = vpop.f32.mrb[0].mxu0
        %604 = vmatprep.mubr.bf16.mxu0 0
        %605 = vmatmul.mubr.bf16.gmra.mrb[0].mxu0 %v556
        %v606 = vpop.f32.mrb[0].mxu0
        %v607 = vadd.f32 0.0, %v606
        %v608 = vpop.f32.mrb[0].mxu0
        %v609 = vpop.f32.mrb[0].mxu0
        %v610 = vadd.f32 0.0, %v609
        %v611 = vpop.f32.mrb[0].mxu0
        %612 = vmatprep.mubr.bf16.mxu0 0
        %613 = vmatmul.mubr.bf16.gmra.mrb[0].mxu0 %v559
        %v614 = vpop.f32.mrb[0].mxu0
        %v615 = vadd.f32 0.0, %v614
        %v616 = vpop.f32.mrb[0].mxu0
        %v617 = vpop.f32.mrb[0].mxu0
        %v618 = vadd.f32 0.0, %v617
        %v619 = vpop.f32.mrb[0].mxu0
        %620 = vmatprep.mubr.bf16.mxu0 0
        %621 = vmatmul.mubr.bf16.gmra.mrb[0].mxu0 %v562
        %v622 = vpop.f32.mrb[0].mxu0
        %v623 = vadd.f32 0.0, %v622
        %v624 = vpop.f32.mrb[0].mxu0
        %v625 = vpop.f32.mrb[0].mxu0
        %v626 = vadd.f32 0.0, %v625
        %v627 = vpop.f32.mrb[0].mxu0
        %628 = vdwg.mxu0
        %v629 = vld [vmem:[%s3] sm:$0xf]
        %v630 = vld [vmem:[%s3 + $0x4] sm:$0xf]
        %v631 = vld [vmem:[%s3 + $0x8] sm:$0xf]
        %v632 = vld [vmem:[%s3 + $0xc] sm:$0xf]
        %v637 = vunpack.c.l.b16 %v629
        %v638 = vunpack.c.l.b16 %v630
        %v639 = vunpack.c.l.b16 %v631
        %v640 = vunpack.c.l.b16 %v632
        %v641 = vpack.c.b16 %v638, %v637
        %v642 = vpack.c.b16 %v640, %v639
        %645 = vmatprep.subr.bf16.mxu0 0
        %646 = vmatpush1.bf16.msra.mxu0 %v641
        %647 = vmatprep.subr.bf16.mxu0 0
        %648 = vmatpush1.bf16.msra.mxu0 %v642
        %649 = vmatprep.subr.bf16.mxu0 0
        %650 = vmatpush1.bf16.msra.mxu0 0
        %651 = vmatprep.subr.bf16.mxu0 0
        %652 = vmatpush1.bf16.msra.mxu0 0
        %653 = vmatprep.subr.bf16.mxu0 0
        %654 = vmatpush1.bf16.msra.mxu0 0
        %655 = vmatprep.subr.bf16.mxu0 0
        %656 = vmatpush1.bf16.msra.mxu0 0
        %657 = vmatprep.subr.bf16.mxu0 0
        %658 = vmatpush1.bf16.msra.mxu0 0
        %659 = vmatprep.subr.bf16.mxu0 0
        %660 = vmatpush1.bf16.msra.mxu0 0
        %661 = vmatprep.subr.bf16.mxu0 0
        %662 = vmatpush1.bf16.msra.mxu0 0
        %663 = vmatprep.subr.bf16.mxu0 0
        %664 = vmatpush1.bf16.msra.mxu0 0
        %665 = vmatprep.subr.bf16.mxu0 0
        %666 = vmatpush1.bf16.msra.mxu0 0
        %667 = vmatprep.subr.bf16.mxu0 0
        %668 = vmatpush1.bf16.msra.mxu0 0
        %669 = vmatprep.subr.bf16.mxu0 0
        %670 = vmatpush1.bf16.msra.mxu0 0
        %671 = vmatprep.subr.bf16.mxu0 0
        %672 = vmatpush1.bf16.msra.mxu0 0
        %673 = vmatprep.subr.bf16.mxu0 0
        %674 = vmatpush1.bf16.msra.mxu0 0
        %675 = vmatprep.subr.bf16.mxu0 0
        %676 = vmatpush1.bf16.msra.mxu0 0
        %677 = vmatprep.mubr.bf16.mxu0 0
        %678 = vmatmul.mubr.bf16.gmra.mrb[0].mxu0 %v553
        %v679 = vpop.f32.mrb[0].mxu0
        %v680 = vadd.f32 0.0, %v679
        %v681 = vpop.f32.mrb[0].mxu0
        %v682 = vpop.f32.mrb[0].mxu0
        %v683 = vadd.f32 0.0, %v682
        %v684 = vpop.f32.mrb[0].mxu0
        %685 = vmatprep.mubr.bf16.mxu0 0
        %686 = vmatmul.mubr.bf16.gmra.mrb[0].mxu0 %v556
        %v687 = vpop.f32.mrb[0].mxu0
        %v688 = vadd.f32 0.0, %v687
        %v689 = vpop.f32.mrb[0].mxu0
        %v690 = vpop.f32.mrb[0].mxu0
        %v691 = vadd.f32 0.0, %v690
        %v692 = vpop.f32.mrb[0].mxu0
        %693 = vmatprep.mubr.bf16.mxu0 0
        %694 = vmatmul.mubr.bf16.gmra.mrb[0].mxu0 %v559
        %v695 = vpop.f32.mrb[0].mxu0
        %v696 = vadd.f32 0.0, %v695
        %v697 = vpop.f32.mrb[0].mxu0
        %v698 = vpop.f32.mrb[0].mxu0
        %v699 = vadd.f32 0.0, %v698
        %v700 = vpop.f32.mrb[0].mxu0
        %701 = vmatprep.mubr.bf16.mxu0 0
        %702 = vmatmul.mubr.bf16.gmra.mrb[0].mxu0 %v562
        %v703 = vpop.f32.mrb[0].mxu0
        %v704 = vadd.f32 0.0, %v703
        %v705 = vpop.f32.mrb[0].mxu0
        %v706 = vpop.f32.mrb[0].mxu0
        %v707 = vadd.f32 0.0, %v706
        %v708 = vpop.f32.mrb[0].mxu0
        %709 = vdwg.mxu0
        %v710 = vld [vmem:[#allocation2] sm:$0xff]
        %v711 = vld [vmem:[#allocation2 + $0x8] sm:$0xff]
        %v712 = vld [vmem:[#allocation2 + $0x10] sm:$0xff]
        %v713 = vld [vmem:[#allocation2 + $0x18] sm:$0xff]
        %v714 = vpack.c.bf16 %v602, %v599
        %v715 = vpack.c.bf16 %v610, %v607
        %v716 = vpack.c.bf16 %v618, %v615
        %v717 = vpack.c.bf16 %v626, %v623
        %v718 = vmax.bf16 %v710, %v714
        %v719 = vmax.bf16 %v711, %v715
        %v720 = vmax.bf16 %v712, %v716
        %v721 = vmax.bf16 %v713, %v717
        %722 = vst.msk [vmem:[#allocation2] sm:$0xff] %vm489, %v718
        %723 = vst.msk [vmem:[#allocation2 + $0x8] sm:$0xff] %vm489, %v719
        %724 = vst.msk [vmem:[#allocation2 + $0x10] sm:$0xff] %vm489, %v720
        %725 = vst.msk [vmem:[#allocation2 + $0x18] sm:$0xff] %vm489, %v721
        %v726 = vld [vmem:[#allocation3] sm:$0xff]
        %v727 = vld [vmem:[#allocation3 + $0x8] sm:$0xff]
        %v728 = vld [vmem:[#allocation3 + $0x10] sm:$0xff]
        %v729 = vld [vmem:[#allocation3 + $0x18] sm:$0xff]
        %v730 = vpack.c.bf16 %v683, %v680
        %v731 = vpack.c.bf16 %v691, %v688
        %v732 = vpack.c.bf16 %v699, %v696
        %v733 = vpack.c.bf16 %v707, %v704
        %v734 = vmax.bf16 %v726, %v730
        %v735 = vmax.bf16 %v727, %v731
        %v736 = vmax.bf16 %v728, %v732
        %v737 = vmax.bf16 %v729, %v733
        %738 = vst.msk [vmem:[#allocation3] sm:$0xff] %vm498, %v734
        %739 = vst.msk [vmem:[#allocation3 + $0x8] sm:$0xff] %vm498, %v735
        %740 = vst.msk [vmem:[#allocation3 + $0x10] sm:$0xff] %vm498, %v736
        %741 = vst.msk [vmem:[#allocation3 + $0x18] sm:$0xff] %vm498, %v737
        %v742 = vld [vmem:[%s265 + $0x40] sm:$0xf]
        %v743 = vld [vmem:[%s265 + $0x44] sm:$0xf]
        %v744 = vld [vmem:[%s265 + $0x48] sm:$0xf]
        %v745 = vld [vmem:[%s265 + $0x4c] sm:$0xf]
        %v746 = vld [vmem:[%s265 + $0x50] sm:$0xf]
        %v747 = vld [vmem:[%s265 + $0x54] sm:$0xf]
        %v748 = vld [vmem:[%s265 + $0x58] sm:$0xf]
        %v749 = vld [vmem:[%s265 + $0x5c] sm:$0xf]
        %v750 = vld [vmem:[%s2] sm:$0xf]
        %v751 = vld [vmem:[%s2 + $0x4] sm:$0xf]
        %v752 = vld [vmem:[%s2 + $0x8] sm:$0xf]
        %v753 = vld [vmem:[%s2 + $0xc] sm:$0xf]
        %v762 = vunpack.c.l.b16 %v742
        %v763 = vunpack.c.l.b16 %v743
        %v764 = vunpack.c.l.b16 %v744
        %v765 = vunpack.c.l.b16 %v745
        %v766 = vunpack.c.l.b16 %v746
        %v767 = vunpack.c.l.b16 %v747
        %v768 = vunpack.c.l.b16 %v748
        %v769 = vunpack.c.l.b16 %v749
        %v770 = vpack.c.b16 %v763, %v762
        %v771 = vpack.c.b16 %v765, %v764
        %v772 = vpack.c.b16 %v767, %v766
        %v773 = vpack.c.b16 %v769, %v768
        %v778 = vunpack.c.l.b16 %v750
        %v779 = vunpack.c.l.b16 %v751
        %v780 = vunpack.c.l.b16 %v752
        %v781 = vunpack.c.l.b16 %v753
        %v782 = vpack.c.b16 %v779, %v778
        %v783 = vpack.c.b16 %v781, %v780
        %v787 = vsel %vm326, %v770, 0
        %v790 = vsel %vm326, %v771, 0
        %v793 = vsel %vm326, %v772, 0
        %v796 = vsel %vm326, %v773, 0
        %798 = vmatprep.subr.bf16.mxu0 0
        %799 = vmatpush1.bf16.msra.mxu0 %v782
        %800 = vmatprep.subr.bf16.mxu0 0
        %801 = vmatpush1.bf16.msra.mxu0 %v783
        %802 = vmatprep.subr.bf16.mxu0 0
        %803 = vmatpush1.bf16.msra.mxu0 0
        %804 = vmatprep.subr.bf16.mxu0 0
        %805 = vmatpush1.bf16.msra.mxu0 0
        %806 = vmatprep.subr.bf16.mxu0 0
        %807 = vmatpush1.bf16.msra.mxu0 0
        %808 = vmatprep.subr.bf16.mxu0 0
        %809 = vmatpush1.bf16.msra.mxu0 0
        %810 = vmatprep.subr.bf16.mxu0 0
        %811 = vmatpush1.bf16.msra.mxu0 0
        %812 = vmatprep.subr.bf16.mxu0 0
        %813 = vmatpush1.bf16.msra.mxu0 0
        %814 = vmatprep.subr.bf16.mxu0 0
        %815 = vmatpush1.bf16.msra.mxu0 0
        %816 = vmatprep.subr.bf16.mxu0 0
        %817 = vmatpush1.bf16.msra.mxu0 0
        %818 = vmatprep.subr.bf16.mxu0 0
        %819 = vmatpush1.bf16.msra.mxu0 0
        %820 = vmatprep.subr.bf16.mxu0 0
        %821 = vmatpush1.bf16.msra.mxu0 0
        %822 = vmatprep.subr.bf16.mxu0 0
        %823 = vmatpush1.bf16.msra.mxu0 0
        %824 = vmatprep.subr.bf16.mxu0 0
        %825 = vmatpush1.bf16.msra.mxu0 0
        %826 = vmatprep.subr.bf16.mxu0 0
        %827 = vmatpush1.bf16.msra.mxu0 0
        %828 = vmatprep.subr.bf16.mxu0 0
        %829 = vmatpush1.bf16.msra.mxu0 0
        %830 = vmatprep.mubr.bf16.mxu0 0
        %831 = vmatmul.mubr.bf16.gmra.mrb[0].mxu0 %v787
        %v832 = vpop.f32.mrb[0].mxu0
        %v833 = vadd.f32 0.0, %v832
        %v834 = vpop.f32.mrb[0].mxu0
        %v835 = vpop.f32.mrb[0].mxu0
        %v836 = vadd.f32 0.0, %v835
        %v837 = vpop.f32.mrb[0].mxu0
        %838 = vmatprep.mubr.bf16.mxu0 0
        %839 = vmatmul.mubr.bf16.gmra.mrb[0].mxu0 %v790
        %v840 = vpop.f32.mrb[0].mxu0
        %v841 = vadd.f32 0.0, %v840
        %v842 = vpop.f32.mrb[0].mxu0
        %v843 = vpop.f32.mrb[0].mxu0
        %v844 = vadd.f32 0.0, %v843
        %v845 = vpop.f32.mrb[0].mxu0
        %846 = vmatprep.mubr.bf16.mxu0 0
        %847 = vmatmul.mubr.bf16.gmra.mrb[0].mxu0 %v793
        %v848 = vpop.f32.mrb[0].mxu0
        %v849 = vadd.f32 0.0, %v848
        %v850 = vpop.f32.mrb[0].mxu0
        %v851 = vpop.f32.mrb[0].mxu0
        %v852 = vadd.f32 0.0, %v851
        %v853 = vpop.f32.mrb[0].mxu0
        %854 = vmatprep.mubr.bf16.mxu0 0
        %855 = vmatmul.mubr.bf16.gmra.mrb[0].mxu0 %v796
        %v856 = vpop.f32.mrb[0].mxu0
        %v857 = vadd.f32 0.0, %v856
        %v858 = vpop.f32.mrb[0].mxu0
        %v859 = vpop.f32.mrb[0].mxu0
        %v860 = vadd.f32 0.0, %v859
        %v861 = vpop.f32.mrb[0].mxu0
        %862 = vdwg.mxu0
        %v863 = vld [vmem:[%s3] sm:$0xf]
        %v864 = vld [vmem:[%s3 + $0x4] sm:$0xf]
        %v865 = vld [vmem:[%s3 + $0x8] sm:$0xf]
        %v866 = vld [vmem:[%s3 + $0xc] sm:$0xf]
        %v871 = vunpack.c.l.b16 %v863
        %v872 = vunpack.c.l.b16 %v864
        %v873 = vunpack.c.l.b16 %v865
        %v874 = vunpack.c.l.b16 %v866
        %v875 = vpack.c.b16 %v872, %v871
        %v876 = vpack.c.b16 %v874, %v873
        %879 = vmatprep.subr.bf16.mxu0 0
        %880 = vmatpush1.bf16.msra.mxu0 %v875
        %881 = vmatprep.subr.bf16.mxu0 0
        %882 = vmatpush1.bf16.msra.mxu0 %v876
        %883 = vmatprep.subr.bf16.mxu0 0
        %884 = vmatpush1.bf16.msra.mxu0 0
        %885 = vmatprep.subr.bf16.mxu0 0
        %886 = vmatpush1.bf16.msra.mxu0 0
        %887 = vmatprep.subr.bf16.mxu0 0
        %888 = vmatpush1.bf16.msra.mxu0 0
        %889 = vmatprep.subr.bf16.mxu0 0
        %890 = vmatpush1.bf16.msra.mxu0 0
        %891 = vmatprep.subr.bf16.mxu0 0
        %892 = vmatpush1.bf16.msra.mxu0 0
        %893 = vmatprep.subr.bf16.mxu0 0
        %894 = vmatpush1.bf16.msra.mxu0 0
        %895 = vmatprep.subr.bf16.mxu0 0
        %896 = vmatpush1.bf16.msra.mxu0 0
        %897 = vmatprep.subr.bf16.mxu0 0
        %898 = vmatpush1.bf16.msra.mxu0 0
        %899 = vmatprep.subr.bf16.mxu0 0
        %900 = vmatpush1.bf16.msra.mxu0 0
        %901 = vmatprep.subr.bf16.mxu0 0
        %902 = vmatpush1.bf16.msra.mxu0 0
        %903 = vmatprep.subr.bf16.mxu0 0
        %904 = vmatpush1.bf16.msra.mxu0 0
        %905 = vmatprep.subr.bf16.mxu0 0
        %906 = vmatpush1.bf16.msra.mxu0 0
        %907 = vmatprep.subr.bf16.mxu0 0
        %908 = vmatpush1.bf16.msra.mxu0 0
        %909 = vmatprep.subr.bf16.mxu0 0
        %910 = vmatpush1.bf16.msra.mxu0 0
        %911 = vmatprep.mubr.bf16.mxu0 0
        %912 = vmatmul.mubr.bf16.gmra.mrb[0].mxu0 %v787
        %v913 = vpop.f32.mrb[0].mxu0
        %v914 = vadd.f32 0.0, %v913
        %v915 = vpop.f32.mrb[0].mxu0
        %v916 = vpop.f32.mrb[0].mxu0
        %v917 = vadd.f32 0.0, %v916
        %v918 = vpop.f32.mrb[0].mxu0
        %919 = vmatprep.mubr.bf16.mxu0 0
        %920 = vmatmul.mubr.bf16.gmra.mrb[0].mxu0 %v790
        %v921 = vpop.f32.mrb[0].mxu0
        %v922 = vadd.f32 0.0, %v921
        %v923 = vpop.f32.mrb[0].mxu0
        %v924 = vpop.f32.mrb[0].mxu0
        %v925 = vadd.f32 0.0, %v924
        %v926 = vpop.f32.mrb[0].mxu0
        %927 = vmatprep.mubr.bf16.mxu0 0
        %928 = vmatmul.mubr.bf16.gmra.mrb[0].mxu0 %v793
        %v929 = vpop.f32.mrb[0].mxu0
        %v930 = vadd.f32 0.0, %v929
        %v931 = vpop.f32.mrb[0].mxu0
        %v932 = vpop.f32.mrb[0].mxu0
        %v933 = vadd.f32 0.0, %v932
        %v934 = vpop.f32.mrb[0].mxu0
        %935 = vmatprep.mubr.bf16.mxu0 0
        %936 = vmatmul.mubr.bf16.gmra.mrb[0].mxu0 %v796
        %v937 = vpop.f32.mrb[0].mxu0
        %v938 = vadd.f32 0.0, %v937
        %v939 = vpop.f32.mrb[0].mxu0
        %v940 = vpop.f32.mrb[0].mxu0
        %v941 = vadd.f32 0.0, %v940
        %v942 = vpop.f32.mrb[0].mxu0
        %943 = vdwg.mxu0
        %v944 = vld [vmem:[#allocation2] sm:$0xff]
        %v945 = vld [vmem:[#allocation2 + $0x8] sm:$0xff]
        %v946 = vld [vmem:[#allocation2 + $0x10] sm:$0xff]
        %v947 = vld [vmem:[#allocation2 + $0x18] sm:$0xff]
        %v948 = vpack.c.bf16 %v836, %v833
        %v949 = vpack.c.bf16 %v844, %v841
        %v950 = vpack.c.bf16 %v852, %v849
        %v951 = vpack.c.bf16 %v860, %v857
        %v952 = vmax.bf16 %v944, %v948
        %v953 = vmax.bf16 %v945, %v949
        %v954 = vmax.bf16 %v946, %v950
        %v955 = vmax.bf16 %v947, %v951
        %956 = vst.msk [vmem:[#allocation2] sm:$0xff] %vm489, %v952
        %957 = vst.msk [vmem:[#allocation2 + $0x8] sm:$0xff] %vm489, %v953
        %958 = vst.msk [vmem:[#allocation2 + $0x10] sm:$0xff] %vm489, %v954
        %959 = vst.msk [vmem:[#allocation2 + $0x18] sm:$0xff] %vm489, %v955
        %v960 = vld [vmem:[#allocation3] sm:$0xff]
        %v961 = vld [vmem:[#allocation3 + $0x8] sm:$0xff]
        %v962 = vld [vmem:[#allocation3 + $0x10] sm:$0xff]
        %v963 = vld [vmem:[#allocation3 + $0x18] sm:$0xff]
        %v964 = vpack.c.bf16 %v917, %v914
        %v965 = vpack.c.bf16 %v925, %v922
        %v966 = vpack.c.bf16 %v933, %v930
        %v967 = vpack.c.bf16 %v941, %v938
        %v968 = vmax.bf16 %v960, %v964
        %v969 = vmax.bf16 %v961, %v965
        %v970 = vmax.bf16 %v962, %v966
        %v971 = vmax.bf16 %v963, %v967
        %972 = vst.msk [vmem:[#allocation3] sm:$0xff] %vm498, %v968
        %973 = vst.msk [vmem:[#allocation3 + $0x8] sm:$0xff] %vm498, %v969
        %974 = vst.msk [vmem:[#allocation3 + $0x10] sm:$0xff] %vm498, %v970
        %975 = vst.msk [vmem:[#allocation3 + $0x18] sm:$0xff] %vm498, %v971
        %v976 = vld [vmem:[%s265 + $0x60] sm:$0xf]
        %v977 = vld [vmem:[%s265 + $0x64] sm:$0xf]
        %v978 = vld [vmem:[%s265 + $0x68] sm:$0xf]
        %v979 = vld [vmem:[%s265 + $0x6c] sm:$0xf]
        %v980 = vld [vmem:[%s265 + $0x70] sm:$0xf]
        %v981 = vld [vmem:[%s265 + $0x74] sm:$0xf]
        %v982 = vld [vmem:[%s265 + $0x78] sm:$0xf]
        %v983 = vld [vmem:[%s265 + $0x7c] sm:$0xf]
        %v984 = vld [vmem:[%s2] sm:$0xf]
        %v985 = vld [vmem:[%s2 + $0x4] sm:$0xf]
        %v986 = vld [vmem:[%s2 + $0x8] sm:$0xf]
        %v987 = vld [vmem:[%s2 + $0xc] sm:$0xf]
        %v996 = vunpack.c.l.b16 %v976
        %v997 = vunpack.c.l.b16 %v977
        %v998 = vunpack.c.l.b16 %v978
        %v999 = vunpack.c.l.b16 %v979
        %v1000 = vunpack.c.l.b16 %v980
        %v1001 = vunpack.c.l.b16 %v981
        %v1002 = vunpack.c.l.b16 %v982
        %v1003 = vunpack.c.l.b16 %v983
        %v1004 = vpack.c.b16 %v997, %v996
        %v1005 = vpack.c.b16 %v999, %v998
        %v1006 = vpack.c.b16 %v1001, %v1000
        %v1007 = vpack.c.b16 %v1003, %v1002
        %v1012 = vunpack.c.l.b16 %v984
        %v1013 = vunpack.c.l.b16 %v985
        %v1014 = vunpack.c.l.b16 %v986
        %v1015 = vunpack.c.l.b16 %v987
        %v1016 = vpack.c.b16 %v1013, %v1012
        %v1017 = vpack.c.b16 %v1015, %v1014
        %v1021 = vsel %vm326, %v1004, 0
        %v1024 = vsel %vm326, %v1005, 0
        %v1027 = vsel %vm326, %v1006, 0
        %v1030 = vsel %vm326, %v1007, 0
        %1032 = vmatprep.subr.bf16.mxu0 0
        %1033 = vmatpush1.bf16.msra.mxu0 %v1016
        %1034 = vmatprep.subr.bf16.mxu0 0
        %1035 = vmatpush1.bf16.msra.mxu0 %v1017
        %1036 = vmatprep.subr.bf16.mxu0 0
        %1037 = vmatpush1.bf16.msra.mxu0 0
        %1038 = vmatprep.subr.bf16.mxu0 0
        %1039 = vmatpush1.bf16.msra.mxu0 0
        %1040 = vmatprep.subr.bf16.mxu0 0
        %1041 = vmatpush1.bf16.msra.mxu0 0
        %1042 = vmatprep.subr.bf16.mxu0 0
        %1043 = vmatpush1.bf16.msra.mxu0 0
        %1044 = vmatprep.subr.bf16.mxu0 0
        %1045 = vmatpush1.bf16.msra.mxu0 0
        %1046 = vmatprep.subr.bf16.mxu0 0
        %1047 = vmatpush1.bf16.msra.mxu0 0
        %1048 = vmatprep.subr.bf16.mxu0 0
        %1049 = vmatpush1.bf16.msra.mxu0 0
        %1050 = vmatprep.subr.bf16.mxu0 0
        %1051 = vmatpush1.bf16.msra.mxu0 0
        %1052 = vmatprep.subr.bf16.mxu0 0
        %1053 = vmatpush1.bf16.msra.mxu0 0
        %1054 = vmatprep.subr.bf16.mxu0 0
        %1055 = vmatpush1.bf16.msra.mxu0 0
        %1056 = vmatprep.subr.bf16.mxu0 0
        %1057 = vmatpush1.bf16.msra.mxu0 0
        %1058 = vmatprep.subr.bf16.mxu0 0
        %1059 = vmatpush1.bf16.msra.mxu0 0
        %1060 = vmatprep.subr.bf16.mxu0 0
        %1061 = vmatpush1.bf16.msra.mxu0 0
        %1062 = vmatprep.subr.bf16.mxu0 0
        %1063 = vmatpush1.bf16.msra.mxu0 0
        %1064 = vmatprep.mubr.bf16.mxu0 0
        %1065 = vmatmul.mubr.bf16.gmra.mrb[0].mxu0 %v1021
        %v1066 = vpop.f32.mrb[0].mxu0
        %v1067 = vadd.f32 0.0, %v1066
        %v1068 = vpop.f32.mrb[0].mxu0
        %v1069 = vpop.f32.mrb[0].mxu0
        %v1070 = vadd.f32 0.0, %v1069
        %v1071 = vpop.f32.mrb[0].mxu0
        %1072 = vmatprep.mubr.bf16.mxu0 0
        %1073 = vmatmul.mubr.bf16.gmra.mrb[0].mxu0 %v1024
        %v1074 = vpop.f32.mrb[0].mxu0
        %v1075 = vadd.f32 0.0, %v1074
        %v1076 = vpop.f32.mrb[0].mxu0
        %v1077 = vpop.f32.mrb[0].mxu0
        %v1078 = vadd.f32 0.0, %v1077
        %v1079 = vpop.f32.mrb[0].mxu0
        %1080 = vmatprep.mubr.bf16.mxu0 0
        %1081 = vmatmul.mubr.bf16.gmra.mrb[0].mxu0 %v1027
        %v1082 = vpop.f32.mrb[0].mxu0
        %v1083 = vadd.f32 0.0, %v1082
        %v1084 = vpop.f32.mrb[0].mxu0
        %v1085 = vpop.f32.mrb[0].mxu0
        %v1086 = vadd.f32 0.0, %v1085
        %v1087 = vpop.f32.mrb[0].mxu0
        %1088 = vmatprep.mubr.bf16.mxu0 0
        %1089 = vmatmul.mubr.bf16.gmra.mrb[0].mxu0 %v1030
        %v1090 = vpop.f32.mrb[0].mxu0
        %v1091 = vadd.f32 0.0, %v1090
        %v1092 = vpop.f32.mrb[0].mxu0
        %v1093 = vpop.f32.mrb[0].mxu0
        %v1094 = vadd.f32 0.0, %v1093
        %v1095 = vpop.f32.mrb[0].mxu0
        %1096 = vdwg.mxu0
        %v1097 = vld [vmem:[%s3] sm:$0xf]
        %v1098 = vld [vmem:[%s3 + $0x4] sm:$0xf]
        %v1099 = vld [vmem:[%s3 + $0x8] sm:$0xf]
        %v1100 = vld [vmem:[%s3 + $0xc] sm:$0xf]
        %v1105 = vunpack.c.l.b16 %v1097
        %v1106 = vunpack.c.l.b16 %v1098
        %v1107 = vunpack.c.l.b16 %v1099
        %v1108 = vunpack.c.l.b16 %v1100
        %v1109 = vpack.c.b16 %v1106, %v1105
        %v1110 = vpack.c.b16 %v1108, %v1107
        %1113 = vmatprep.subr.bf16.mxu0 0
        %1114 = vmatpush1.bf16.msra.mxu0 %v1109
        %1115 = vmatprep.subr.bf16.mxu0 0
        %1116 = vmatpush1.bf16.msra.mxu0 %v1110
        %1117 = vmatprep.subr.bf16.mxu0 0
        %1118 = vmatpush1.bf16.msra.mxu0 0
        %1119 = vmatprep.subr.bf16.mxu0 0
        %1120 = vmatpush1.bf16.msra.mxu0 0
        %1121 = vmatprep.subr.bf16.mxu0 0
        %1122 = vmatpush1.bf16.msra.mxu0 0
        %1123 = vmatprep.subr.bf16.mxu0 0
        %1124 = vmatpush1.bf16.msra.mxu0 0
        %1125 = vmatprep.subr.bf16.mxu0 0
        %1126 = vmatpush1.bf16.msra.mxu0 0
        %1127 = vmatprep.subr.bf16.mxu0 0
        %1128 = vmatpush1.bf16.msra.mxu0 0
        %1129 = vmatprep.subr.bf16.mxu0 0
        %1130 = vmatpush1.bf16.msra.mxu0 0
        %1131 = vmatprep.subr.bf16.mxu0 0
        %1132 = vmatpush1.bf16.msra.mxu0 0
        %1133 = vmatprep.subr.bf16.mxu0 0
        %1134 = vmatpush1.bf16.msra.mxu0 0
        %1135 = vmatprep.subr.bf16.mxu0 0
        %1136 = vmatpush1.bf16.msra.mxu0 0
        %1137 = vmatprep.subr.bf16.mxu0 0
        %1138 = vmatpush1.bf16.msra.mxu0 0
        %1139 = vmatprep.subr.bf16.mxu0 0
        %1140 = vmatpush1.bf16.msra.mxu0 0
        %1141 = vmatprep.subr.bf16.mxu0 0
        %1142 = vmatpush1.bf16.msra.mxu0 0
        %1143 = vmatprep.subr.bf16.mxu0 0
        %1144 = vmatpush1.bf16.msra.mxu0 0
        %1145 = vmatprep.mubr.bf16.mxu0 0
        %1146 = vmatmul.mubr.bf16.gmra.mrb[0].mxu0 %v1021
        %v1147 = vpop.f32.mrb[0].mxu0
        %v1148 = vadd.f32 0.0, %v1147
        %v1149 = vpop.f32.mrb[0].mxu0
        %v1150 = vpop.f32.mrb[0].mxu0
        %v1151 = vadd.f32 0.0, %v1150
        %v1152 = vpop.f32.mrb[0].mxu0
        %1153 = vmatprep.mubr.bf16.mxu0 0
        %1154 = vmatmul.mubr.bf16.gmra.mrb[0].mxu0 %v1024
        %v1155 = vpop.f32.mrb[0].mxu0
        %v1156 = vadd.f32 0.0, %v1155
        %v1157 = vpop.f32.mrb[0].mxu0
        %v1158 = vpop.f32.mrb[0].mxu0
        %v1159 = vadd.f32 0.0, %v1158
        %v1160 = vpop.f32.mrb[0].mxu0
        %1161 = vmatprep.mubr.bf16.mxu0 0
        %1162 = vmatmul.mubr.bf16.gmra.mrb[0].mxu0 %v1027
        %v1163 = vpop.f32.mrb[0].mxu0
        %v1164 = vadd.f32 0.0, %v1163
        %v1165 = vpop.f32.mrb[0].mxu0
        %v1166 = vpop.f32.mrb[0].mxu0
        %v1167 = vadd.f32 0.0, %v1166
        %v1168 = vpop.f32.mrb[0].mxu0
        %1169 = vmatprep.mubr.bf16.mxu0 0
        %1170 = vmatmul.mubr.bf16.gmra.mrb[0].mxu0 %v1030
        %v1171 = vpop.f32.mrb[0].mxu0
        %v1172 = vadd.f32 0.0, %v1171
        %v1173 = vpop.f32.mrb[0].mxu0
        %v1174 = vpop.f32.mrb[0].mxu0
        %v1175 = vadd.f32 0.0, %v1174
        %v1176 = vpop.f32.mrb[0].mxu0
        %1177 = vdwg.mxu0
        %v1178 = vld [vmem:[#allocation2] sm:$0xff]
        %v1179 = vld [vmem:[#allocation2 + $0x8] sm:$0xff]
        %v1180 = vld [vmem:[#allocation2 + $0x10] sm:$0xff]
        %v1181 = vld [vmem:[#allocation2 + $0x18] sm:$0xff]
        %v1182 = vpack.c.bf16 %v1070, %v1067
        %v1183 = vpack.c.bf16 %v1078, %v1075
        %v1184 = vpack.c.bf16 %v1086, %v1083
        %v1185 = vpack.c.bf16 %v1094, %v1091
        %v1186 = vmax.bf16 %v1178, %v1182
        %v1187 = vmax.bf16 %v1179, %v1183
        %v1188 = vmax.bf16 %v1180, %v1184
        %v1189 = vmax.bf16 %v1181, %v1185
        %1190 = vst.msk [vmem:[#allocation2] sm:$0xff] %vm489, %v1186
        %1191 = vst.msk [vmem:[#allocation2 + $0x8] sm:$0xff] %vm489, %v1187
        %1192 = vst.msk [vmem:[#allocation2 + $0x10] sm:$0xff] %vm489, %v1188
        %1193 = vst.msk [vmem:[#allocation2 + $0x18] sm:$0xff] %vm489, %v1189
        %v1194 = vld [vmem:[#allocation3] sm:$0xff]
        %v1195 = vld [vmem:[#allocation3 + $0x8] sm:$0xff]
        %v1196 = vld [vmem:[#allocation3 + $0x10] sm:$0xff]
        %v1197 = vld [vmem:[#allocation3 + $0x18] sm:$0xff]
        %v1198 = vpack.c.bf16 %v1151, %v1148
        %v1199 = vpack.c.bf16 %v1159, %v1156
        %v1200 = vpack.c.bf16 %v1167, %v1164
        %v1201 = vpack.c.bf16 %v1175, %v1172
        %v1202 = vmax.bf16 %v1194, %v1198
        %v1203 = vmax.bf16 %v1195, %v1199
        %v1204 = vmax.bf16 %v1196, %v1200
        %v1205 = vmax.bf16 %v1197, %v1201
        %1206 = vst.msk [vmem:[#allocation3] sm:$0xff] %vm498, %v1202
        %1207 = vst.msk [vmem:[#allocation3 + $0x8] sm:$0xff] %vm498, %v1203
        %1208 = vst.msk [vmem:[#allocation3 + $0x10] sm:$0xff] %vm498, %v1204
        %1209 = vst.msk [vmem:[#allocation3 + $0x18] sm:$0xff] %vm498, %v1205
      $region48: #{tpu_custom_call.1} parent=43 // pred_fallthru
        _
      %s1210 = smul.u32 %s23, 128
      %s1211 = sshra.s32 %s1210, 3
      %s1212 = sand.u32 %s1210, 7
      %s1213 = smul.addr %s1211, 4
      %s1214 = scalar_lea.vmem %s265, %s1213
      %v1215 = vld [vmem:[%s1214] sm:$0xf]
      %v1216 = vld [vmem:[%s1214 + $0x4] sm:$0xf]
      %v1217 = vld [vmem:[%s1214 + $0x8] sm:$0xf]
      %v1218 = vld [vmem:[%s1214 + $0xc] sm:$0xf]
      %v1219 = vld [vmem:[%s1214 + $0x10] sm:$0xf]
      %v1220 = vld [vmem:[%s1214 + $0x14] sm:$0xf]
      %v1221 = vld [vmem:[%s1214 + $0x18] sm:$0xf]
      %v1222 = vld [vmem:[%s1214 + $0x1c] sm:$0xf]
      %v1223 = vld [vmem:[%s1214 + $0x20] sm:$0xf]
      %v1224 = vld [vmem:[%s1214 + $0x24] sm:$0xf]
      %v1225 = vld [vmem:[%s1214 + $0x28] sm:$0xf]
      %v1226 = vld [vmem:[%s1214 + $0x2c] sm:$0xf]
      %v1227 = vld [vmem:[%s1214 + $0x30] sm:$0xf]
      %v1228 = vld [vmem:[%s1214 + $0x34] sm:$0xf]
      %v1229 = vld [vmem:[%s1214 + $0x38] sm:$0xf]
      %v1230 = vld [vmem:[%s1214 + $0x3c] sm:$0xf]
      %v1231 = vld [vmem:[%s1] sm:$0xf]
      %v1232 = vld [vmem:[%s1 + $0x4] sm:$0xf]
      %v1233 = vld [vmem:[%s1 + $0x8] sm:$0xf]
      %v1234 = vld [vmem:[%s1 + $0xc] sm:$0xf]
      %v1251 = vunpack.c.l.b16 %v1215
      %v1252 = vunpack.c.l.b16 %v1216
      %v1253 = vunpack.c.l.b16 %v1217
      %v1254 = vunpack.c.l.b16 %v1218
      %v1255 = vunpack.c.l.b16 %v1219
      %v1256 = vunpack.c.l.b16 %v1220
      %v1257 = vunpack.c.l.b16 %v1221
      %v1258 = vunpack.c.l.b16 %v1222
      %v1259 = vunpack.c.l.b16 %v1223
      %v1260 = vunpack.c.l.b16 %v1224
      %v1261 = vunpack.c.l.b16 %v1225
      %v1262 = vunpack.c.l.b16 %v1226
      %v1263 = vunpack.c.l.b16 %v1227
      %v1264 = vunpack.c.l.b16 %v1228
      %v1265 = vunpack.c.l.b16 %v1229
      %v1266 = vunpack.c.l.b16 %v1230
      %v1267 = vpack.c.b16 %v1252, %v1251
      %v1268 = vpack.c.b16 %v1254, %v1253
      %v1269 = vpack.c.b16 %v1256, %v1255
      %v1270 = vpack.c.b16 %v1258, %v1257
      %v1271 = vpack.c.b16 %v1260, %v1259
      %v1272 = vpack.c.b16 %v1262, %v1261
      %v1273 = vpack.c.b16 %v1264, %v1263
      %v1274 = vpack.c.b16 %v1266, %v1265
      %v1279 = vunpack.c.l.b16 %v1231
      %v1280 = vunpack.c.l.b16 %v1232
      %v1281 = vunpack.c.l.b16 %v1233
      %v1282 = vunpack.c.l.b16 %v1234
      %v1283 = vpack.c.b16 %v1280, %v1279
      %v1284 = vpack.c.b16 %v1282, %v1281
      %vm1287 = vcmask 261120
      %v1289 = vsel %vm1287, %v1267, 0
      %v1292 = vsel %vm1287, %v1268, 0
      %v1295 = vsel %vm1287, %v1269, 0
      %v1298 = vsel %vm1287, %v1270, 0
      %v1301 = vsel %vm1287, %v1271, 0
      %v1304 = vsel %vm1287, %v1272, 0
      %v1307 = vsel %vm1287, %v1273, 0
      %v1310 = vsel %vm1287, %v1274, 0
      %1312 = vmatprep.subr.bf16.mxu0 0
      %1313 = vmatpush1.bf16.msra.mxu0 %v1283
      %1314 = vmatprep.subr.bf16.mxu0 0
      %1315 = vmatpush1.bf16.msra.mxu0 %v1284
      %1316 = vmatprep.subr.bf16.mxu0 0
      %1317 = vmatpush1.bf16.msra.mxu0 0
      %1318 = vmatprep.subr.bf16.mxu0 0
      %1319 = vmatpush1.bf16.msra.mxu0 0
      %1320 = vmatprep.subr.bf16.mxu0 0
      %1321 = vmatpush1.bf16.msra.mxu0 0
      %1322 = vmatprep.subr.bf16.mxu0 0
      %1323 = vmatpush1.bf16.msra.mxu0 0
      %1324 = vmatprep.subr.bf16.mxu0 0
      %1325 = vmatpush1.bf16.msra.mxu0 0
      %1326 = vmatprep.subr.bf16.mxu0 0
      %1327 = vmatpush1.bf16.msra.mxu0 0
      %1328 = vmatprep.subr.bf16.mxu0 0
      %1329 = vmatpush1.bf16.msra.mxu0 0
      %1330 = vmatprep.subr.bf16.mxu0 0
      %1331 = vmatpush1.bf16.msra.mxu0 0
      %1332 = vmatprep.subr.bf16.mxu0 0
      %1333 = vmatpush1.bf16.msra.mxu0 0
      %1334 = vmatprep.subr.bf16.mxu0 0
      %1335 = vmatpush1.bf16.msra.mxu0 0
      %1336 = vmatprep.subr.bf16.mxu0 0
      %1337 = vmatpush1.bf16.msra.mxu0 0
      %1338 = vmatprep.subr.bf16.mxu0 0
      %1339 = vmatpush1.bf16.msra.mxu0 0
      %1340 = vmatprep.subr.bf16.mxu0 0
      %1341 = vmatpush1.bf16.msra.mxu0 0
      %1342 = vmatprep.subr.bf16.mxu0 0
      %1343 = vmatpush1.bf16.msra.mxu0 0
      %1344 = vmatprep.mubr.bf16.mxu0 0
      %1345 = vmatmul.mubr.bf16.gmra.mrb[0].mxu0 %v1289
      %v1346 = vpop.f32.mrb[0].mxu0
      %v1347 = vadd.f32 0.0, %v1346
      %v1348 = vpop.f32.mrb[0].mxu0
      %v1349 = vpop.f32.mrb[0].mxu0
      %v1350 = vadd.f32 0.0, %v1349
      %v1351 = vpop.f32.mrb[0].mxu0
      %1352 = vmatprep.mubr.bf16.mxu0 0
      %1353 = vmatmul.mubr.bf16.gmra.mrb[0].mxu0 %v1292
      %v1354 = vpop.f32.mrb[0].mxu0
      %v1355 = vadd.f32 0.0, %v1354
      %v1356 = vpop.f32.mrb[0].mxu0
      %v1357 = vpop.f32.mrb[0].mxu0
      %v1358 = vadd.f32 0.0, %v1357
      %v1359 = vpop.f32.mrb[0].mxu0
      %1360 = vmatprep.mubr.bf16.mxu0 0
      %1361 = vmatmul.mubr.bf16.gmra.mrb[0].mxu0 %v1295
      %v1362 = vpop.f32.mrb[0].mxu0
      %v1363 = vadd.f32 0.0, %v1362
      %v1364 = vpop.f32.mrb[0].mxu0
      %v1365 = vpop.f32.mrb[0].mxu0
      %v1366 = vadd.f32 0.0, %v1365
      %v1367 = vpop.f32.mrb[0].mxu0
      %1368 = vmatprep.mubr.bf16.mxu0 0
      %1369 = vmatmul.mubr.bf16.gmra.mrb[0].mxu0 %v1298
      %v1370 = vpop.f32.mrb[0].mxu0
      %v1371 = vadd.f32 0.0, %v1370
      %v1372 = vpop.f32.mrb[0].mxu0
      %v1373 = vpop.f32.mrb[0].mxu0
      %v1374 = vadd.f32 0.0, %v1373
      %v1375 = vpop.f32.mrb[0].mxu0
      %1376 = vmatprep.mubr.bf16.mxu0 0
      %1377 = vmatmul.mubr.bf16.gmra.mrb[0].mxu0 %v1301
      %v1378 = vpop.f32.mrb[0].mxu0
      %v1379 = vadd.f32 0.0, %v1378
      %v1380 = vpop.f32.mrb[0].mxu0
      %v1381 = vpop.f32.mrb[0].mxu0
      %v1382 = vadd.f32 0.0, %v1381
      %v1383 = vpop.f32.mrb[0].mxu0
      %1384 = vmatprep.mubr.bf16.mxu0 0
      %1385 = vmatmul.mubr.bf16.gmra.mrb[0].mxu0 %v1304
      %v1386 = vpop.f32.mrb[0].mxu0
      %v1387 = vadd.f32 0.0, %v1386
      %v1388 = vpop.f32.mrb[0].mxu0
      %v1389 = vpop.f32.mrb[0].mxu0
      %v1390 = vadd.f32 0.0, %v1389
      %v1391 = vpop.f32.mrb[0].mxu0
      %1392 = vmatprep.mubr.bf16.mxu0 0
      %1393 = vmatmul.mubr.bf16.gmra.mrb[0].mxu0 %v1307
      %v1394 = vpop.f32.mrb[0].mxu0
      %v1395 = vadd.f32 0.0, %v1394
      %v1396 = vpop.f32.mrb[0].mxu0
      %v1397 = vpop.f32.mrb[0].mxu0
      %v1398 = vadd.f32 0.0, %v1397
      %v1399 = vpop.f32.mrb[0].mxu0
      %1400 = vmatprep.mubr.bf16.mxu0 0
      %1401 = vmatmul.mubr.bf16.gmra.mrb[0].mxu0 %v1310
      %v1402 = vpop.f32.mrb[0].mxu0
      %v1403 = vadd.f32 0.0, %v1402
      %v1404 = vpop.f32.mrb[0].mxu0
      %v1405 = vpop.f32.mrb[0].mxu0
      %v1406 = vadd.f32 0.0, %v1405
      %v1407 = vpop.f32.mrb[0].mxu0
      %1408 = vdwg.mxu0
      %v1409 = vpack.c.bf16 %v1350, %v1347
      %v1410 = vpack.c.bf16 %v1358, %v1355
      %v1411 = vpack.c.bf16 %v1366, %v1363
      %v1412 = vpack.c.bf16 %v1374, %v1371
      %v1413 = vpack.c.bf16 %v1382, %v1379
      %v1414 = vpack.c.bf16 %v1390, %v1387
      %v1415 = vpack.c.bf16 %v1398, %v1395
      %v1416 = vpack.c.bf16 %v1406, %v1403
      %v1417 = vld [vmem:[#allocation2] sm:$0xff]
      %v1418 = vld [vmem:[#allocation2 + $0x8] sm:$0xff]
      %v1419 = vld [vmem:[#allocation2 + $0x10] sm:$0xff]
      %v1420 = vld [vmem:[#allocation2 + $0x18] sm:$0xff]
      %vm1421 = vcmask 31744
      %v1423 = vsel %vm1421, %v1409, 0
      %v1426 = vsel %vm1421, %v1410, 0
      %v1429 = vsel %vm1421, %v1411, 0
      %v1432 = vsel %vm1421, %v1412, 0
      %v1435 = vsel %vm1421, %v1413, 0
      %v1438 = vsel %vm1421, %v1414, 0
      %v1441 = vsel %vm1421, %v1415, 0
      %v1444 = vsel %vm1421, %v1416, 0
      %v1447 = vsel %vm1421, %v1417, 0
      %v1450 = vsel %vm1421, %v1418, 0
      %v1453 = vsel %vm1421, %v1419, 0
      %v1456 = vsel %vm1421, %v1420, 0
      %1458 = vmatprep.subr.bf16.mxu0 0
      %1459 = vmatpush1.bf16.xpose.msra.mxu0 %v1447
      %1460 = vmatprep.subr.bf16.mxu0 0
      %1461 = vmatpush1.bf16.xpose.msra.mxu0 %v1450
      %1462 = vmatprep.subr.bf16.mxu0 0
      %1463 = vmatpush1.bf16.xpose.msra.mxu0 %v1453
      %1464 = vmatprep.subr.bf16.mxu0 0
      %1465 = vmatpush1.bf16.xpose.msra.mxu0 %v1456
      %1466 = vmatprep.subr.bf16.mxu0 0
      %1467 = vmatpush1.bf16.xpose.msra.mxu0 0
      %1468 = vmatprep.subr.bf16.mxu0 0
      %1469 = vmatpush1.bf16.xpose.msra.mxu0 0
      %1470 = vmatprep.subr.bf16.mxu0 0
      %1471 = vmatpush1.bf16.xpose.msra.mxu0 0
      %1472 = vmatprep.subr.bf16.mxu0 0
      %1473 = vmatpush1.bf16.xpose.msra.mxu0 0
      %1474 = vmatprep.subr.bf16.mxu0 0
      %1475 = vmatpush1.bf16.xpose.msra.mxu0 0
      %1476 = vmatprep.subr.bf16.mxu0 0
      %1477 = vmatpush1.bf16.xpose.msra.mxu0 0
      %1478 = vmatprep.subr.bf16.mxu0 0
      %1479 = vmatpush1.bf16.xpose.msra.mxu0 0
      %1480 = vmatprep.subr.bf16.mxu0 0
      %1481 = vmatpush1.bf16.xpose.msra.mxu0 0
      %1482 = vmatprep.subr.bf16.mxu0 0
      %1483 = vmatpush1.bf16.xpose.msra.mxu0 0
      %1484 = vmatprep.subr.bf16.mxu0 0
      %1485 = vmatpush1.bf16.xpose.msra.mxu0 0
      %1486 = vmatprep.subr.bf16.mxu0 0
      %1487 = vmatpush1.bf16.xpose.msra.mxu0 0
      %1488 = vmatprep.subr.bf16.mxu0 0
      %1489 = vmatpush1.bf16.xpose.msra.mxu0 0
      %1490 = vmatprep.mubr.bf16.mxu0 0
      %1491 = vmatmul.mubr.bf16.gmra.mrb[0].mxu0 %v1423
      %v1492 = vpop.f32.mrb[0].mxu0
      %v1493 = vadd.f32 0.0, %v1492
      %v1494 = vpop.f32.mrb[0].mxu0
      %v1495 = vpop.f32.mrb[0].mxu0
      %v1496 = vadd.f32 0.0, %v1495
      %v1497 = vpop.f32.mrb[0].mxu0
      %1498 = vmatprep.mubr.bf16.mxu0 0
      %1499 = vmatmul.mubr.bf16.gmra.mrb[0].mxu0 %v1426
      %v1500 = vpop.f32.mrb[0].mxu0
      %v1501 = vadd.f32 0.0, %v1500
      %v1502 = vpop.f32.mrb[0].mxu0
      %v1503 = vpop.f32.mrb[0].mxu0
      %v1504 = vadd.f32 0.0, %v1503
      %v1505 = vpop.f32.mrb[0].mxu0
      %1506 = vmatprep.mubr.bf16.mxu0 0
      %1507 = vmatmul.mubr.bf16.gmra.mrb[0].mxu0 %v1429
      %v1508 = vpop.f32.mrb[0].mxu0
      %v1509 = vadd.f32 0.0, %v1508
      %v1510 = vpop.f32.mrb[0].mxu0
      %v1511 = vpop.f32.mrb[0].mxu0
      %v1512 = vadd.f32 0.0, %v1511
      %v1513 = vpop.f32.mrb[0].mxu0
      %1514 = vmatprep.mubr.bf16.mxu0 0
      %1515 = vmatmul.mubr.bf16.gmra.mrb[0].mxu0 %v1432
      %v1516 = vpop.f32.mrb[0].mxu0
      %v1517 = vadd.f32 0.0, %v1516
      %v1518 = vpop.f32.mrb[0].mxu0
      %v1519 = vpop.f32.mrb[0].mxu0
      %v1520 = vadd.f32 0.0, %v1519
      %v1521 = vpop.f32.mrb[0].mxu0
      %1522 = vmatprep.mubr.bf16.mxu0 0
      %1523 = vmatmul.mubr.bf16.gmra.mrb[0].mxu0 %v1435
      %v1524 = vpop.f32.mrb[0].mxu0
      %v1525 = vadd.f32 0.0, %v1524
      %v1526 = vpop.f32.mrb[0].mxu0
      %v1527 = vpop.f32.mrb[0].mxu0
      %v1528 = vadd.f32 0.0, %v1527
      %v1529 = vpop.f32.mrb[0].mxu0
      %1530 = vmatprep.mubr.bf16.mxu0 0
      %1531 = vmatmul.mubr.bf16.gmra.mrb[0].mxu0 %v1438
      %v1532 = vpop.f32.mrb[0].mxu0
      %v1533 = vadd.f32 0.0, %v1532
      %v1534 = vpop.f32.mrb[0].mxu0
      %v1535 = vpop.f32.mrb[0].mxu0
      %v1536 = vadd.f32 0.0, %v1535
      %v1537 = vpop.f32.mrb[0].mxu0
      %1538 = vmatprep.mubr.bf16.mxu0 0
      %1539 = vmatmul.mubr.bf16.gmra.mrb[0].mxu0 %v1441
      %v1540 = vpop.f32.mrb[0].mxu0
      %v1541 = vadd.f32 0.0, %v1540
      %v1542 = vpop.f32.mrb[0].mxu0
      %v1543 = vpop.f32.mrb[0].mxu0
      %v1544 = vadd.f32 0.0, %v1543
      %v1545 = vpop.f32.mrb[0].mxu0
      %1546 = vmatprep.mubr.bf16.mxu0 0
      %1547 = vmatmul.mubr.bf16.gmra.mrb[0].mxu0 %v1444
      %v1548 = vpop.f32.mrb[0].mxu0
      %v1549 = vadd.f32 0.0, %v1548
      %v1550 = vpop.f32.mrb[0].mxu0
      %v1551 = vpop.f32.mrb[0].mxu0
      %v1552 = vadd.f32 0.0, %v1551
      %v1553 = vpop.f32.mrb[0].mxu0
      %1554 = vdwg.mxu0
      %vm1555 = vcmask 523264
      %v1556 = vsel %vm1555, %v1493, -inf
      %1557 = vmax.xlane.f32.xlu0 %v1556
      %v1558 = vpop.xlane.xlu0 %1557
      %v1559 = vsel %vm1555, %v1496, -inf
      %1560 = vmax.xlane.f32.xlu0 %v1559
      %v1561 = vpop.xlane.xlu0 %1560
      %v1562 = vsel %vm1555, %v1501, -inf
      %1563 = vmax.xlane.f32.xlu0 %v1562
      %v1564 = vpop.xlane.xlu0 %1563
      %v1565 = vsel %vm1555, %v1504, -inf
      %1566 = vmax.xlane.f32.xlu0 %v1565
      %v1567 = vpop.xlane.xlu0 %1566
      %v1568 = vsel %vm1555, %v1509, -inf
      %1569 = vmax.xlane.f32.xlu0 %v1568
      %v1570 = vpop.xlane.xlu0 %1569
      %v1571 = vsel %vm1555, %v1512, -inf
      %1572 = vmax.xlane.f32.xlu0 %v1571
      %v1573 = vpop.xlane.xlu0 %1572
      %v1574 = vsel %vm1555, %v1517, -inf
      %1575 = vmax.xlane.f32.xlu0 %v1574
      %v1576 = vpop.xlane.xlu0 %1575
      %v1577 = vsel %vm1555, %v1520, -inf
      %1578 = vmax.xlane.f32.xlu0 %v1577
      %v1579 = vpop.xlane.xlu0 %1578
      %v1580 = vsel %vm1555, %v1525, -inf
      %1581 = vmax.xlane.f32.xlu0 %v1580
      %v1582 = vpop.xlane.xlu0 %1581
      %v1583 = vsel %vm1555, %v1528, -inf
      %1584 = vmax.xlane.f32.xlu0 %v1583
      %v1585 = vpop.xlane.xlu0 %1584
      %v1586 = vsel %vm1555, %v1533, -inf
      %1587 = vmax.xlane.f32.xlu0 %v1586
      %v1588 = vpop.xlane.xlu0 %1587
      %v1589 = vsel %vm1555, %v1536, -inf
      %1590 = vmax.xlane.f32.xlu0 %v1589
      %v1591 = vpop.xlane.xlu0 %1590
      %v1592 = vsel %vm1555, %v1541, -inf
      %1593 = vmax.xlane.f32.xlu0 %v1592
      %v1594 = vpop.xlane.xlu0 %1593
      %v1595 = vsel %vm1555, %v1544, -inf
      %1596 = vmax.xlane.f32.xlu0 %v1595
      %v1597 = vpop.xlane.xlu0 %1596
      %v1598 = vsel %vm1555, %v1549, -inf
      %1599 = vmax.xlane.f32.xlu0 %v1598
      %v1600 = vpop.xlane.xlu0 %1599
      %v1601 = vsel %vm1555, %v1552, -inf
      %1602 = vmax.xlane.f32.xlu0 %v1601
      %v1603 = vpop.xlane.xlu0 %1602
      %v1604 = vsub.f32 %v1493, %v1558
      %v1605 = vsub.f32 %v1496, %v1561
      %v1606 = vsub.f32 %v1501, %v1564
      %v1607 = vsub.f32 %v1504, %v1567
      %v1608 = vsub.f32 %v1509, %v1570
      %v1609 = vsub.f32 %v1512, %v1573
      %v1610 = vsub.f32 %v1517, %v1576
      %v1611 = vsub.f32 %v1520, %v1579
      %v1612 = vsub.f32 %v1525, %v1582
      %v1613 = vsub.f32 %v1528, %v1585
      %v1614 = vsub.f32 %v1533, %v1588
      %v1615 = vsub.f32 %v1536, %v1591
      %v1616 = vsub.f32 %v1541, %v1594
      %v1617 = vsub.f32 %v1544, %v1597
      %v1618 = vsub.f32 %v1549, %v1600
      %v1619 = vsub.f32 %v1552, %v1603
      %v1620 = vpack.c.bf16 %v1605, %v1604
      %v1621 = vpack.c.bf16 %v1607, %v1606
      %v1622 = vpack.c.bf16 %v1609, %v1608
      %v1623 = vpack.c.bf16 %v1611, %v1610
      %v1624 = vpack.c.bf16 %v1613, %v1612
      %v1625 = vpack.c.bf16 %v1615, %v1614
      %v1626 = vpack.c.bf16 %v1617, %v1616
      %v1627 = vpack.c.bf16 %v1619, %v1618
      %v1629 = vmul.bf16 %v1620, 1069105081
      %v1630 = vpow.bf16.pop %v1629
      %v1632 = vmul.bf16 %v1621, 1069105081
      %v1633 = vpow.bf16.pop %v1632
      %v1635 = vmul.bf16 %v1622, 1069105081
      %v1636 = vpow.bf16.pop %v1635
      %v1638 = vmul.bf16 %v1623, 1069105081
      %v1639 = vpow.bf16.pop %v1638
      %v1641 = vmul.bf16 %v1624, 1069105081
      %v1642 = vpow.bf16.pop %v1641
      %v1644 = vmul.bf16 %v1625, 1069105081
      %v1645 = vpow.bf16.pop %v1644
      %v1647 = vmul.bf16 %v1626, 1069105081
      %v1648 = vpow.bf16.pop %v1647
      %v1650 = vmul.bf16 %v1627, 1069105081
      %v1651 = vpow.bf16.pop %v1650
      %v1652 = vld [vmem:[#allocation3] sm:$0xff]
      %v1653 = vld [vmem:[#allocation3 + $0x8] sm:$0xff]
      %v1654 = vld [vmem:[#allocation3 + $0x10] sm:$0xff]
      %v1655 = vld [vmem:[#allocation3 + $0x18] sm:$0xff]
      %v1657 = vsel %vm1555, %v1630, 0
      %v1660 = vsel %vm1555, %v1633, 0
      %v1663 = vsel %vm1555, %v1636, 0
      %v1666 = vsel %vm1555, %v1639, 0
      %v1669 = vsel %vm1555, %v1642, 0
      %v1672 = vsel %vm1555, %v1645, 0
      %v1675 = vsel %vm1555, %v1648, 0
      %v1678 = vsel %vm1555, %v1651, 0
      %1680 = vmatprep.subr.bf16.mxu0 0
      %1681 = vmatpush1.bf16.msra.mxu0 %v1652
      %1682 = vmatprep.subr.bf16.mxu0 0
      %1683 = vmatpush1.bf16.msra.mxu0 %v1653
      %1684 = vmatprep.subr.bf16.mxu0 0
      %1685 = vmatpush1.bf16.msra.mxu0 %v1654
      %1686 = vmatprep.subr.bf16.mxu0 0
      %1687 = vmatpush1.bf16.msra.mxu0 %v1655
      %1688 = vmatprep.subr.bf16.mxu0 0
      %1689 = vmatpush1.bf16.msra.mxu0 0
      %1690 = vmatprep.subr.bf16.mxu0 0
      %1691 = vmatpush1.bf16.msra.mxu0 0
      %1692 = vmatprep.subr.bf16.mxu0 0
      %1693 = vmatpush1.bf16.msra.mxu0 0
      %1694 = vmatprep.subr.bf16.mxu0 0
      %1695 = vmatpush1.bf16.msra.mxu0 0
      %1696 = vmatprep.subr.bf16.mxu0 0
      %1697 = vmatpush1.bf16.msra.mxu0 0
      %1698 = vmatprep.subr.bf16.mxu0 0
      %1699 = vmatpush1.bf16.msra.mxu0 0
      %1700 = vmatprep.subr.bf16.mxu0 0
      %1701 = vmatpush1.bf16.msra.mxu0 0
      %1702 = vmatprep.subr.bf16.mxu0 0
      %1703 = vmatpush1.bf16.msra.mxu0 0
      %1704 = vmatprep.subr.bf16.mxu0 0
      %1705 = vmatpush1.bf16.msra.mxu0 0
      %1706 = vmatprep.subr.bf16.mxu0 0
      %1707 = vmatpush1.bf16.msra.mxu0 0
      %1708 = vmatprep.subr.bf16.mxu0 0
      %1709 = vmatpush1.bf16.msra.mxu0 0
      %1710 = vmatprep.subr.bf16.mxu0 0
      %1711 = vmatpush1.bf16.msra.mxu0 0
      %1712 = vmatprep.mubr.bf16.mxu0 0
      %1713 = vmatmul.mubr.bf16.gmra.mrb[0].mxu0 %v1657
      %v1714 = vpop.f32.mrb[0].mxu0
      %v1715 = vadd.f32 0.0, %v1714
      %v1716 = vpop.f32.mrb[0].mxu0
      %v1717 = vpop.f32.mrb[0].mxu0
      %v1718 = vadd.f32 0.0, %v1717
      %v1719 = vpop.f32.mrb[0].mxu0
      %1720 = vmatprep.mubr.bf16.mxu0 0
      %1721 = vmatmul.mubr.bf16.gmra.mrb[0].mxu0 %v1660
      %v1722 = vpop.f32.mrb[0].mxu0
      %v1723 = vadd.f32 0.0, %v1722
      %v1724 = vpop.f32.mrb[0].mxu0
      %v1725 = vpop.f32.mrb[0].mxu0
      %v1726 = vadd.f32 0.0, %v1725
      %v1727 = vpop.f32.mrb[0].mxu0
      %1728 = vmatprep.mubr.bf16.mxu0 0
      %1729 = vmatmul.mubr.bf16.gmra.mrb[0].mxu0 %v1663
      %v1730 = vpop.f32.mrb[0].mxu0
      %v1731 = vadd.f32 0.0, %v1730
      %v1732 = vpop.f32.mrb[0].mxu0
      %v1733 = vpop.f32.mrb[0].mxu0
      %v1734 = vadd.f32 0.0, %v1733
      %v1735 = vpop.f32.mrb[0].mxu0
      %1736 = vmatprep.mubr.bf16.mxu0 0
      %1737 = vmatmul.mubr.bf16.gmra.mrb[0].mxu0 %v1666
      %v1738 = vpop.f32.mrb[0].mxu0
      %v1739 = vadd.f32 0.0, %v1738
      %v1740 = vpop.f32.mrb[0].mxu0
      %v1741 = vpop.f32.mrb[0].mxu0
      %v1742 = vadd.f32 0.0, %v1741
      %v1743 = vpop.f32.mrb[0].mxu0
      %1744 = vmatprep.mubr.bf16.mxu0 0
      %1745 = vmatmul.mubr.bf16.gmra.mrb[0].mxu0 %v1669
      %v1746 = vpop.f32.mrb[0].mxu0
      %v1747 = vadd.f32 0.0, %v1746
      %v1748 = vpop.f32.mrb[0].mxu0
      %v1749 = vpop.f32.mrb[0].mxu0
      %v1750 = vadd.f32 0.0, %v1749
      %v1751 = vpop.f32.mrb[0].mxu0
      %1752 = vmatprep.mubr.bf16.mxu0 0
      %1753 = vmatmul.mubr.bf16.gmra.mrb[0].mxu0 %v1672
      %v1754 = vpop.f32.mrb[0].mxu0
      %v1755 = vadd.f32 0.0, %v1754
      %v1756 = vpop.f32.mrb[0].mxu0
      %v1757 = vpop.f32.mrb[0].mxu0
      %v1758 = vadd.f32 0.0, %v1757
      %v1759 = vpop.f32.mrb[0].mxu0
      %1760 = vmatprep.mubr.bf16.mxu0 0
      %1761 = vmatmul.mubr.bf16.gmra.mrb[0].mxu0 %v1675
      %v1762 = vpop.f32.mrb[0].mxu0
      %v1763 = vadd.f32 0.0, %v1762
      %v1764 = vpop.f32.mrb[0].mxu0
      %v1765 = vpop.f32.mrb[0].mxu0
      %v1766 = vadd.f32 0.0, %v1765
      %v1767 = vpop.f32.mrb[0].mxu0
      %1768 = vmatprep.mubr.bf16.mxu0 0
      %1769 = vmatmul.mubr.bf16.gmra.mrb[0].mxu0 %v1678
      %v1770 = vpop.f32.mrb[0].mxu0
      %v1771 = vadd.f32 0.0, %v1770
      %v1772 = vpop.f32.mrb[0].mxu0
      %v1773 = vpop.f32.mrb[0].mxu0
      %v1774 = vadd.f32 0.0, %v1773
      %v1775 = vpop.f32.mrb[0].mxu0
      %1776 = vdwg.mxu0
      %v1777 = vrcp.pop %v1715
      %v1778 = vrcp.pop %v1718
      %v1779 = vrcp.pop %v1723
      %v1780 = vrcp.pop %v1726
      %v1781 = vrcp.pop %v1731
      %v1782 = vrcp.pop %v1734
      %v1783 = vrcp.pop %v1739
      %v1784 = vrcp.pop %v1742
      %v1785 = vrcp.pop %v1747
      %v1786 = vrcp.pop %v1750
      %v1787 = vrcp.pop %v1755
      %v1788 = vrcp.pop %v1758
      %v1789 = vrcp.pop %v1763
      %v1790 = vrcp.pop %v1766
      %v1791 = vrcp.pop %v1771
      %v1792 = vrcp.pop %v1774
      %1794 = vset.pattern.permute.xlu0 16
      %1795 = vperm.xlu0 %1794, %v1777
      %v1796 = vpop.permute.xlu0 %1795
      %1799 = vset.pattern.permute.xlu0 16
      %1800 = vperm.xlu0 %1799, %v1778
      %v1801 = vpop.permute.xlu0 %1800
      %1804 = vset.pattern.permute.xlu0 16
      %1805 = vperm.xlu0 %1804, %v1779
      %v1806 = vpop.permute.xlu0 %1805
      %1809 = vset.pattern.permute.xlu0 16
      %1810 = vperm.xlu0 %1809, %v1780
      %v1811 = vpop.permute.xlu0 %1810
      %1814 = vset.pattern.permute.xlu0 16
      %1815 = vperm.xlu0 %1814, %v1781
      %v1816 = vpop.permute.xlu0 %1815
      %1819 = vset.pattern.permute.xlu0 16
      %1820 = vperm.xlu0 %1819, %v1782
      %v1821 = vpop.permute.xlu0 %1820
      %1824 = vset.pattern.permute.xlu0 16
      %1825 = vperm.xlu0 %1824, %v1783
      %v1826 = vpop.permute.xlu0 %1825
      %1829 = vset.pattern.permute.xlu0 16
      %1830 = vperm.xlu0 %1829, %v1784
      %v1831 = vpop.permute.xlu0 %1830
      %1834 = vset.pattern.permute.xlu0 16
      %1835 = vperm.xlu0 %1834, %v1785
      %v1836 = vpop.permute.xlu0 %1835
      %1839 = vset.pattern.permute.xlu0 16
      %1840 = vperm.xlu0 %1839, %v1786
      %v1841 = vpop.permute.xlu0 %1840
      %1844 = vset.pattern.permute.xlu0 16
      %1845 = vperm.xlu0 %1844, %v1787
      %v1846 = vpop.permute.xlu0 %1845
      %1849 = vset.pattern.permute.xlu0 16
      %1850 = vperm.xlu0 %1849, %v1788
      %v1851 = vpop.permute.xlu0 %1850
      %1854 = vset.pattern.permute.xlu0 16
      %1855 = vperm.xlu0 %1854, %v1789
      %v1856 = vpop.permute.xlu0 %1855
      %1859 = vset.pattern.permute.xlu0 16
      %1860 = vperm.xlu0 %1859, %v1790
      %v1861 = vpop.permute.xlu0 %1860
      %1864 = vset.pattern.permute.xlu0 16
      %1865 = vperm.xlu0 %1864, %v1791
      %v1866 = vpop.permute.xlu0 %1865
      %1869 = vset.pattern.permute.xlu0 16
      %1870 = vperm.xlu0 %1869, %v1792
      %v1871 = vpop.permute.xlu0 %1870
      %v1873 = vmul.f32 %v1715, %v1796
      %v1874 = vmul.f32 %v1718, %v1801
      %v1875 = vmul.f32 %v1723, %v1806
      %v1876 = vmul.f32 %v1726, %v1811
      %v1877 = vmul.f32 %v1731, %v1816
      %v1878 = vmul.f32 %v1734, %v1821
      %v1879 = vmul.f32 %v1739, %v1826
      %v1880 = vmul.f32 %v1742, %v1831
      %v1881 = vmul.f32 %v1747, %v1836
      %v1882 = vmul.f32 %v1750, %v1841
      %v1883 = vmul.f32 %v1755, %v1846
      %v1884 = vmul.f32 %v1758, %v1851
      %v1885 = vmul.f32 %v1763, %v1856
      %v1886 = vmul.f32 %v1766, %v1861
      %v1887 = vmul.f32 %v1771, %v1866
      %v1888 = vmul.f32 %v1774, %v1871
      %v1889 = vpack.c.bf16 %v1874, %v1873
      %v1890 = vpack.c.bf16 %v1876, %v1875
      %v1891 = vpack.c.bf16 %v1878, %v1877
      %v1892 = vpack.c.bf16 %v1880, %v1879
      %v1893 = vpack.c.bf16 %v1882, %v1881
      %v1894 = vpack.c.bf16 %v1884, %v1883
      %v1895 = vpack.c.bf16 %v1886, %v1885
      %v1896 = vpack.c.bf16 %v1888, %v1887
      %v1897 = vld [vmem:[%s4] sm:$0xf]
      %v1898 = vld [vmem:[%s4 + $0x4] sm:$0xf]
      %v1901 = vunpack.c.l.b16 %v1897
      %v1902 = vunpack.c.l.b16 %v1898
      %v1903 = vpack.c.b16 %v1902, %v1901
      %vm1905 = vcmask 130048
      %v1907 = vsel %vm1905, %v1889, 0
      %v1910 = vsel %vm1905, %v1890, 0
      %v1913 = vsel %vm1905, %v1891, 0
      %v1916 = vsel %vm1905, %v1892, 0
      %v1919 = vsel %vm1905, %v1893, 0
      %v1922 = vsel %vm1905, %v1894, 0
      %v1925 = vsel %vm1905, %v1895, 0
      %v1928 = vsel %vm1905, %v1896, 0
      %1930 = vmatprep.subr.bf16.mxu0 0
      %1931 = vmatpush1.bf16.msra.mxu0 %v1903
      %1932 = vmatprep.subr.bf16.mxu0 0
      %1933 = vmatpush1.bf16.msra.mxu0 0
      %1934 = vmatprep.subr.bf16.mxu0 0
      %1935 = vmatpush1.bf16.msra.mxu0 0
      %1936 = vmatprep.subr.bf16.mxu0 0
      %1937 = vmatpush1.bf16.msra.mxu0 0
      %1938 = vmatprep.subr.bf16.mxu0 0
      %1939 = vmatpush1.bf16.msra.mxu0 0
      %1940 = vmatprep.subr.bf16.mxu0 0
      %1941 = vmatpush1.bf16.msra.mxu0 0
      %1942 = vmatprep.subr.bf16.mxu0 0
      %1943 = vmatpush1.bf16.msra.mxu0 0
      %1944 = vmatprep.subr.bf16.mxu0 0
      %1945 = vmatpush1.bf16.msra.mxu0 0
      %1946 = vmatprep.subr.bf16.mxu0 0
      %1947 = vmatpush1.bf16.msra.mxu0 0
      %1948 = vmatprep.subr.bf16.mxu0 0
      %1949 = vmatpush1.bf16.msra.mxu0 0
      %1950 = vmatprep.subr.bf16.mxu0 0
      %1951 = vmatpush1.bf16.msra.mxu0 0
      %1952 = vmatprep.subr.bf16.mxu0 0
      %1953 = vmatpush1.bf16.msra.mxu0 0
      %1954 = vmatprep.subr.bf16.mxu0 0
      %1955 = vmatpush1.bf16.msra.mxu0 0
      %1956 = vmatprep.subr.bf16.mxu0 0
      %1957 = vmatpush1.bf16.msra.mxu0 0
      %1958 = vmatprep.subr.bf16.mxu0 0
      %1959 = vmatpush1.bf16.msra.mxu0 0
      %1960 = vmatprep.subr.bf16.mxu0 0
      %1961 = vmatpush1.bf16.msra.mxu0 0
      %1962 = vmatprep.mubr.bf16.mxu0 0
      %1963 = vmatmul.mubr.bf16.gmra.mrb[0].mxu0 %v1907
      %v1964 = vpop.f32.mrb[0].mxu0
      %v1965 = vadd.f32 0.0, %v1964
      %v1966 = vpop.f32.mrb[0].mxu0
      %v1967 = vpop.f32.mrb[0].mxu0
      %v1968 = vadd.f32 0.0, %v1967
      %v1969 = vpop.f32.mrb[0].mxu0
      %1970 = vmatprep.mubr.bf16.mxu0 0
      %1971 = vmatmul.mubr.bf16.gmra.mrb[0].mxu0 %v1910
      %v1972 = vpop.f32.mrb[0].mxu0
      %v1973 = vadd.f32 0.0, %v1972
      %v1974 = vpop.f32.mrb[0].mxu0
      %v1975 = vpop.f32.mrb[0].mxu0
      %v1976 = vadd.f32 0.0, %v1975
      %v1977 = vpop.f32.mrb[0].mxu0
      %1978 = vmatprep.mubr.bf16.mxu0 0
      %1979 = vmatmul.mubr.bf16.gmra.mrb[0].mxu0 %v1913
      %v1980 = vpop.f32.mrb[0].mxu0
      %v1981 = vadd.f32 0.0, %v1980
      %v1982 = vpop.f32.mrb[0].mxu0
      %v1983 = vpop.f32.mrb[0].mxu0
      %v1984 = vadd.f32 0.0, %v1983
      %v1985 = vpop.f32.mrb[0].mxu0
      %1986 = vmatprep.mubr.bf16.mxu0 0
      %1987 = vmatmul.mubr.bf16.gmra.mrb[0].mxu0 %v1916
      %v1988 = vpop.f32.mrb[0].mxu0
      %v1989 = vadd.f32 0.0, %v1988
      %v1990 = vpop.f32.mrb[0].mxu0
      %v1991 = vpop.f32.mrb[0].mxu0
      %v1992 = vadd.f32 0.0, %v1991
      %v1993 = vpop.f32.mrb[0].mxu0
      %1994 = vmatprep.mubr.bf16.mxu0 0
      %1995 = vmatmul.mubr.bf16.gmra.mrb[0].mxu0 %v1919
      %v1996 = vpop.f32.mrb[0].mxu0
      %v1997 = vadd.f32 0.0, %v1996
      %v1998 = vpop.f32.mrb[0].mxu0
      %v1999 = vpop.f32.mrb[0].mxu0
      %v2000 = vadd.f32 0.0, %v1999
      %v2001 = vpop.f32.mrb[0].mxu0
      %2002 = vmatprep.mubr.bf16.mxu0 0
      %2003 = vmatmul.mubr.bf16.gmra.mrb[0].mxu0 %v1922
      %v2004 = vpop.f32.mrb[0].mxu0
      %v2005 = vadd.f32 0.0, %v2004
      %v2006 = vpop.f32.mrb[0].mxu0
      %v2007 = vpop.f32.mrb[0].mxu0
      %v2008 = vadd.f32 0.0, %v2007
      %v2009 = vpop.f32.mrb[0].mxu0
      %2010 = vmatprep.mubr.bf16.mxu0 0
      %2011 = vmatmul.mubr.bf16.gmra.mrb[0].mxu0 %v1925
      %v2012 = vpop.f32.mrb[0].mxu0
      %v2013 = vadd.f32 0.0, %v2012
      %v2014 = vpop.f32.mrb[0].mxu0
      %v2015 = vpop.f32.mrb[0].mxu0
      %v2016 = vadd.f32 0.0, %v2015
      %v2017 = vpop.f32.mrb[0].mxu0
      %2018 = vmatprep.mubr.bf16.mxu0 0
      %2019 = vmatmul.mubr.bf16.gmra.mrb[0].mxu0 %v1928
      %v2020 = vpop.f32.mrb[0].mxu0
      %v2021 = vadd.f32 0.0, %v2020
      %v2022 = vpop.f32.mrb[0].mxu0
      %v2023 = vpop.f32.mrb[0].mxu0
      %v2024 = vadd.f32 0.0, %v2023
      %v2025 = vpop.f32.mrb[0].mxu0
      %2026 = vdwg.mxu0
      %s2027 = sld [smem:[#allocation4]]
      %v2028 = vstv %s2027
      %v2029 = vmul.f32 %v2028, %v1965
      %v2030 = vmul.f32 %v2028, %v1968
      %v2031 = vmul.f32 %v2028, %v1973
      %v2032 = vmul.f32 %v2028, %v1976
      %v2033 = vmul.f32 %v2028, %v1981
      %v2034 = vmul.f32 %v2028, %v1984
      %v2035 = vmul.f32 %v2028, %v1989
      %v2036 = vmul.f32 %v2028, %v1992
      %v2037 = vmul.f32 %v2028, %v1997
      %v2038 = vmul.f32 %v2028, %v2000
      %v2039 = vmul.f32 %v2028, %v2005
      %v2040 = vmul.f32 %v2028, %v2008
      %v2041 = vmul.f32 %v2028, %v2013
      %v2042 = vmul.f32 %v2028, %v2016
      %v2043 = vmul.f32 %v2028, %v2021
      %v2044 = vmul.f32 %v2028, %v2024
      %v2045 = vunpack.c.l.bf16 %v1215
      %v2046 = vunpack.c.l.bf16 %v1216
      %v2047 = vunpack.c.l.bf16 %v1217
      %v2048 = vunpack.c.l.bf16 %v1218
      %v2049 = vunpack.c.l.bf16 %v1219
      %v2050 = vunpack.c.l.bf16 %v1220
      %v2051 = vunpack.c.l.bf16 %v1221
      %v2052 = vunpack.c.l.bf16 %v1222
      %v2053 = vunpack.c.l.bf16 %v1223
      %v2054 = vunpack.c.l.bf16 %v1224
      %v2055 = vunpack.c.l.bf16 %v1225
      %v2056 = vunpack.c.l.bf16 %v1226
      %v2057 = vunpack.c.l.bf16 %v1227
      %v2058 = vunpack.c.l.bf16 %v1228
      %v2059 = vunpack.c.l.bf16 %v1229
      %v2060 = vunpack.c.l.bf16 %v1230
      %v2061 = vadd.f32 %v2029, %v2045
      %v2062 = vadd.f32 %v2030, %v2046
      %v2063 = vadd.f32 %v2031, %v2047
      %v2064 = vadd.f32 %v2032, %v2048
      %v2065 = vadd.f32 %v2033, %v2049
      %v2066 = vadd.f32 %v2034, %v2050
      %v2067 = vadd.f32 %v2035, %v2051
      %v2068 = vadd.f32 %v2036, %v2052
      %v2069 = vadd.f32 %v2037, %v2053
      %v2070 = vadd.f32 %v2038, %v2054
      %v2071 = vadd.f32 %v2039, %v2055
      %v2072 = vadd.f32 %v2040, %v2056
      %v2073 = vadd.f32 %v2041, %v2057
      %v2074 = vadd.f32 %v2042, %v2058
      %v2075 = vadd.f32 %v2043, %v2059
      %v2076 = vadd.f32 %v2044, %v2060
      %v2077 = vpack.c.bf16 %v2062, %v2061
      %v2078 = vpack.c.bf16 %v2064, %v2063
      %v2079 = vpack.c.bf16 %v2066, %v2065
      %v2080 = vpack.c.bf16 %v2068, %v2067
      %v2081 = vpack.c.bf16 %v2070, %v2069
      %v2082 = vpack.c.bf16 %v2072, %v2071
      %v2083 = vpack.c.bf16 %v2074, %v2073
      %v2084 = vpack.c.bf16 %v2076, %v2075
      %v2093 = vunpack.c.l.b16 %v2077
      %v2094 = vunpack.c.h.b16 %v2077
      %v2095 = vunpack.c.l.b16 %v2078
      %v2096 = vunpack.c.h.b16 %v2078
      %v2097 = vunpack.c.l.b16 %v2079
      %v2098 = vunpack.c.h.b16 %v2079
      %v2099 = vunpack.c.l.b16 %v2080
      %v2100 = vunpack.c.h.b16 %v2080
      %v2101 = vunpack.c.l.b16 %v2081
      %v2102 = vunpack.c.h.b16 %v2081
      %v2103 = vunpack.c.l.b16 %v2082
      %v2104 = vunpack.c.h.b16 %v2082
      %v2105 = vunpack.c.l.b16 %v2083
      %v2106 = vunpack.c.h.b16 %v2083
      %v2107 = vunpack.c.l.b16 %v2084
      %v2108 = vunpack.c.h.b16 %v2084
      %v2109 = vpack.c.b16 %v2093, %v2093
      %v2110 = vpack.c.b16 %v2094, %v2094
      %v2111 = vpack.c.b16 %v2095, %v2095
      %v2112 = vpack.c.b16 %v2096, %v2096
      %v2113 = vpack.c.b16 %v2097, %v2097
      %v2114 = vpack.c.b16 %v2098, %v2098
      %v2115 = vpack.c.b16 %v2099, %v2099
      %v2116 = vpack.c.b16 %v2100, %v2100
      %v2117 = vpack.c.b16 %v2101, %v2101
      %v2118 = vpack.c.b16 %v2102, %v2102
      %v2119 = vpack.c.b16 %v2103, %v2103
      %v2120 = vpack.c.b16 %v2104, %v2104
      %v2121 = vpack.c.b16 %v2105, %v2105
      %v2122 = vpack.c.b16 %v2106, %v2106
      %v2123 = vpack.c.b16 %v2107, %v2107
      %v2124 = vpack.c.b16 %v2108, %v2108
      %vm2141 = vcmask 257024
      %2142 = vst.msk [vmem:[%s274] sm:$0xf] %vm2141, %v2109
      %2143 = vst.msk [vmem:[%s274 + $0x4] sm:$0xf] %vm2141, %v2110
      %2144 = vst.msk [vmem:[%s274 + $0x8] sm:$0xf] %vm2141, %v2111
      %2145 = vst.msk [vmem:[%s274 + $0xc] sm:$0xf] %vm2141, %v2112
      %2146 = vst.msk [vmem:[%s274 + $0x10] sm:$0xf] %vm2141, %v2113
      %2147 = vst.msk [vmem:[%s274 + $0x14] sm:$0xf] %vm2141, %v2114
      %2148 = vst.msk [vmem:[%s274 + $0x18] sm:$0xf] %vm2141, %v2115
      %2149 = vst.msk [vmem:[%s274 + $0x1c] sm:$0xf] %vm2141, %v2116
      %2150 = vst.msk [vmem:[%s274 + $0x20] sm:$0xf] %vm2141, %v2117
      %2151 = vst.msk [vmem:[%s274 + $0x24] sm:$0xf] %vm2141, %v2118
      %2152 = vst.msk [vmem:[%s274 + $0x28] sm:$0xf] %vm2141, %v2119
      %2153 = vst.msk [vmem:[%s274 + $0x2c] sm:$0xf] %vm2141, %v2120
      %2154 = vst.msk [vmem:[%s274 + $0x30] sm:$0xf] %vm2141, %v2121
      %2155 = vst.msk [vmem:[%s274 + $0x34] sm:$0xf] %vm2141, %v2122
      %2156 = vst.msk [vmem:[%s274 + $0x38] sm:$0xf] %vm2141, %v2123
      %2157 = vst.msk [vmem:[%s274 + $0x3c] sm:$0xf] %vm2141, %v2124
      %s2158 = smul.u32 16, %s23
      %p2159 = scmp.lt.s32.totalorder %s22, 1
      %s2160 = scalar_select %p2159, %s22, 1
      %p2161 = scmp.lt.s32.totalorder %s2158, 31
      %s2162 = scalar_select %p2161, %s2158, 31
      %s2163 = smul.addr %s2160, 32
      %s2164 = sadd.s32 %s2162, %s2163
      %s2165 = smul.addr %s2164, 4
      %s2166 = scalar_lea.vmem %s6, %s2165
      // Predicated region
      $region49: #{tpu_custom_call.1} parent=43 // pred_check
        %p2167 = pneg %p181
      $region50: #{tpu_custom_call.1} parent=43 // pred_check_branch
        %2169 = sbr.rel (%p2167) target = $region52
      $region51: #{tpu_custom_call.1} parent=43 // pred_region
        %s2170 = smul.u32 16, %s23
      $region52: #{tpu_custom_call.1} parent=43 // pred_fallthru
        _
    $region44: #{tpu_custom_call.1} parent=5 // pred_fallthru
      _
    %p2171 = scmp.le.s32.totalorder 2, %s13
    // Predicated region
    $region53: #{tpu_custom_call.1} parent=5 // pred_check
      %p2172 = pneg %p2171
    $region54: #{tpu_custom_call.1} parent=5 // pred_check_branch
      %2174 = sbr.rel (%p2172) target = $region56
    $region55: #{tpu_custom_call.1} parent=5 // pred_region
      %s2175 = ssub.s32 %s13, 2
      // Predicated region
      $region57: #{tpu_custom_call.1} parent=55 // pred_check
        %p2176 = pneg %p187
      $region58: #{tpu_custom_call.1} parent=55 // pred_check_branch
        %2178 = sbr.rel (%p2176) target = $region60
      $region59: #{tpu_custom_call.1} parent=55 // pred_region
        %s2179 = smul.u32 16, %s25
        %p2180 = scmp.lt.s32.totalorder %s24, 1
        %s2181 = scalar_select %p2180, %s24, 1
        %p2182 = scmp.lt.s32.totalorder %s2179, 31
        %s2183 = scalar_select %p2182, %s2179, 31
        %s2184 = smul.addr %s2181, 32
        %s2185 = sadd.s32 %s2183, %s2184
        %s2186 = smul.addr %s2185, 4
        %s2187 = scalar_lea.vmem %s6, %s2186
      $region60: #{tpu_custom_call.1} parent=55 // pred_fallthru
        _
    $region56: #{tpu_custom_call.1} parent=5 // pred_fallthru
      _
  $region6: #{tpu_custom_call.1} parent=0 // loop_footer
    %s17 = sadd.s32 1, %s13
  $region7: #{tpu_custom_call.1} parent=0 // loop_footer_branch
    %12 = sbr.rel target = $region3
  $region8: #{tpu_custom_call.1} parent=0 // loop_exit
    _

</llo_original>
